<compile_context>
chip_gen: v7x
topology: tpu7x:2x2x1
jax: 0.10.0
libtpu: 0.0.40
codegen_flags: <defaults>
</compile_context>

<pallas_src>
import jax
import jax.numpy as jnp
from jax import lax
from jax.experimental import pallas as pl
from jax.experimental.pallas import tpu as pltpu

_VMEM_BUDGET_BYTES = 40 * 1024 * 1024   # tile-selection budget (fits v7x)
_VMEM_LIMIT_BYTES = 48 * 1024 * 1024    # scoped VMEM limit handed to Mosaic


def _round_up(v, m):
    return ((v + m - 1) // m) * m


def _make_esn_kernel(leaky, unroll):
    one_minus_leaky = 1.0 - leaky

    def kernel(x_ref, w_in_ref, w_hh_ref, b_ref, o_ref, h_ref, xw_ref):
        """One (series-block, time-chunk) grid step of the ESN recurrence.

        x_ref : (t_chunk, n_tile, D)           VMEM  input chunk, time-major, f32
        w_in  : (D, H_pad)                     VMEM  matmul dtype (bf16/f32)
        w_hh  : (H_pad, H_pad)                 VMEM  matmul dtype (bf16/f32)
        b     : (1, H_pad)                     VMEM  f32
        o_ref : (t_chunk, n_tile, H_pad)       VMEM  trajectory chunk (out dtype)
        h_ref : (n_tile, H_pad) f32 scratch          hidden carry across chunks
        xw_ref: (t_chunk*n_tile, H_pad) f32 scratch  staged input projection
        """
        t_blk = pl.program_id(1)

        # Per-series hidden reset (esn_cell.reset_hidden()): zero at the first
        # time chunk of every series block.
        @pl.when(t_blk == 0)
        def _():
            h_ref[...] = jnp.zeros_like(h_ref)

        t_chunk, n_tile, d = x_ref.shape

        w_in = w_in_ref[...]
        mm_dtype = w_in.dtype

        # Hoisted input projection (bias folded in): one
        # (t_chunk*n_tile, D) @ (D, H_pad) MXU matmul per chunk, staged to
        # VMEM so the recurrence only holds the hidden slab in vregs.  The
        # leading-dim merge keeps the lane dim D unchanged and n_tile is a
        # multiple of 8, so no relayout copy is expected.
        x2d = x_ref[...].reshape(t_chunk * n_tile, d).astype(mm_dtype)
        xw_ref[...] = (
            jnp.dot(x2d, w_in, preferred_element_type=jnp.float32) + b_ref[...]
        )

        w_hh = w_hh_ref[...]

        # TODO(synk): for H_pad <= 256, pin W_hh in the MXU weight staging
        # registers (pltpu.matmul_push_rhs / matmul_acc_lhs / matmul_pop)
        # across the whole chunk instead of re-streaming it every step.
        def step(t, h):
            row = pl.multiple_of(t * n_tile, n_tile)
            pre = xw_ref[pl.ds(row, n_tile), :] + jnp.dot(
                h.astype(mm_dtype), w_hh, preferred_element_type=jnp.float32)
            # tanh kept in f32 (bf16 tanh on v6e/v7x would double EUP
            # throughput if the ESN accuracy budget allows it).
            h_new = one_minus_leaky * h + leaky * jnp.tanh(pre)
            o_ref[t] = h_new.astype(o_ref.dtype)   # dense (n_tile, H_pad) slab
            return h_new

        h_ref[...] = lax.fori_loop(0, t_chunk, step, h_ref[...], unroll=unroll)

    return kernel


def _choose_tiles(N, T, D, H_pad, mm_bytes, out_bytes, n_tile, t_chunk):
    if n_tile is None:
        # Batch as many series as possible into the matmul M dimension; the
        # per-step recurrent matmul is latency-bound for small M so this is
        # nearly free.  Cap at 128; on v7x prefer configs with
        # N_pad // n_tile >= 2 so the "parallel" axis shards across both TCs.
        n_tile = min(_round_up(N, 8), 128)
    else:
        n_tile = max(8, _round_up(n_tile, 8))

    if t_chunk is None:
        fixed = (H_pad * D * mm_bytes            # W_in  (single-buffered)
                 + H_pad * H_pad * mm_bytes      # W_hh  (single-buffered)
                 + H_pad * 4                     # bias
                 + n_tile * H_pad * 4)           # hidden-carry scratch
        per_t = (2 * n_tile * D * 4                   # x chunk, double-buffered
                 + 2 * n_tile * H_pad * out_bytes     # o chunk, double-buffered
                 + n_tile * H_pad * 4)                # xw staging scratch
        t_chunk = (_VMEM_BUDGET_BYTES - fixed) // per_t
        t_chunk = int(max(8, min(t_chunk, 256)))
        t_chunk = max(8, (t_chunk // 8) * 8)
    t_chunk = int(max(1, min(t_chunk, T)))
    return n_tile, t_chunk


def _esn_pallas(x3d, w_in, w_hh, b, *, leaky, n_tile, t_chunk, matmul_dtype,
                out_dtype):
    """(N, T, D) -> time-major (T_pad, N_pad, H_pad) hidden trajectories."""
    N, T, D = x3d.shape
    H = w_hh.shape[0]
    H_pad = _round_up(H, 128)                     # lane-dense stores

    mm_bytes = jnp.dtype(matmul_dtype).itemsize
    out_bytes = jnp.dtype(out_dtype).itemsize
    n_tile, t_chunk = _choose_tiles(N, T, D, H_pad, mm_bytes, out_bytes,
                                    n_tile, t_chunk)
    N_pad = _round_up(N, n_tile)
    T_pad = _round_up(T, t_chunk)

    # Zero padding is exact: padded reservoir units have zero weights / bias
    # and start at h = 0, so they stay identically zero (tanh(0) = 0).
    w_in_p = jnp.zeros((D, H_pad), jnp.float32).at[:, :H].set(
        w_in.astype(jnp.float32))
    w_hh_p = jnp.zeros((H_pad, H_pad), jnp.float32).at[:H, :H].set(
        w_hh.astype(jnp.float32))
    b_p = jnp.zeros((1, H_pad), jnp.float32).at[:, :H].set(
        jnp.asarray(b, jnp.float32).reshape(1, -1))
    if matmul_dtype != jnp.float32:
        w_in_p = w_in_p.astype(matmul_dtype)
        w_hh_p = w_hh_p.astype(matmul_dtype)

    # Time-major layout so each recurrence step stores a dense
    # (n_tile, H_pad) slab.  x stays f32 in HBM; it is cast to the matmul
    # dtype only inside the kernel.
    x_tm = jnp.zeros((T_pad, N_pad, D), jnp.float32)
    x_tm = x_tm.at[:T, :N, :].set(
        jnp.transpose(x3d.astype(jnp.float32), (1, 0, 2)))

    grid = (N_pad // n_tile, T_pad // t_chunk)
    kernel = _make_esn_kernel(float(leaky), unroll=min(8, t_chunk))

    def build(single_buffer_weights):
        wmode = ({"pipeline_mode": pl.Buffered(1)}
                 if single_buffer_weights else {})
        return pl.pallas_call(
            kernel,
            out_shape=jax.ShapeDtypeStruct((T_pad, N_pad, H_pad), out_dtype),
            grid_spec=pltpu.PrefetchScalarGridSpec(
                num_scalar_prefetch=0,
                grid=grid,
                in_specs=[
                    pl.BlockSpec((t_chunk, n_tile, D), lambda n, t: (t, n, 0)),
                    pl.BlockSpec((D, H_pad), lambda n, t: (0, 0), **wmode),
                    pl.BlockSpec((H_pad, H_pad), lambda n, t: (0, 0), **wmode),
                    pl.BlockSpec((1, H_pad), lambda n, t: (0, 0), **wmode),
                ],
                out_specs=pl.BlockSpec((t_chunk, n_tile, H_pad),
                                       lambda n, t: (t, n, 0)),
                scratch_shapes=[
                    pltpu.VMEM((n_tile, H_pad), jnp.float32),            # h
                    pltpu.VMEM((t_chunk * n_tile, H_pad), jnp.float32),  # xw
                ],
            ),
            compiler_params=pltpu.CompilerParams(
                # Series axis parallel (megacore once N_pad // n_tile >= 2),
                # time axis sequential (hidden-state carry in scratch).
                dimension_semantics=("parallel", "arbitrary"),
                vmem_limit_bytes=_VMEM_LIMIT_BYTES,
            ),
        )

    try:
        # Grid-invariant weights single-buffered to free VMEM for a larger
        # time chunk (most important on v7x's 64 MiB VMEM).
        out = build(True)(x_tm, w_in_p, w_hh_p, b_p)
    except Exception:  # pragma: no cover - jax without BlockSpec.pipeline_mode
        out = build(False)(x_tm, w_in_p, w_hh_p, b_p)
    return out, N, T, H


def multi_time_series_forward(x, w_in, w_hh, b, washout=0, *, leaky=0.5,
                              n_tile=None, t_chunk=None,
                              matmul_dtype=jnp.bfloat16,
                              out_dtype=jnp.float32,
                              time_major_output=False):
    """JAX/Pallas equivalent of MultiTimeSeriesHandler.forward."""
    squeeze = (x.ndim == 2)
    if x.ndim == 2:
        x3d = x[None]
    elif x.ndim == 3:
        x3d = x
    else:
        raise ValueError(
            f"Only Matrices of dim 2 and 3 are supported but dim {x.ndim} was passed."
        )

    out_tm, N, T, H = _esn_pallas(
        x3d, w_in, w_hh, b, leaky=leaky, n_tile=n_tile, t_chunk=t_chunk,
        matmul_dtype=matmul_dtype, out_dtype=out_dtype)

    # TODO(synk): fold `washout` into the output index_map so washed-out steps
    # are never written back to HBM (needs washout % t_chunk handling).
    out_tm = out_tm[washout:T, :N, :H]            # strip padding + washout
    if time_major_output:
        # Time-major (T - washout, N, H): skips the XLA transpose round trip.
        return out_tm[:, 0, :] if squeeze else out_tm
    out = jnp.transpose(out_tm, (1, 0, 2))        # (N, T - washout, H)
    return out[0] if squeeze else out


def _reference_forward(x, w_in, w_hh, b, washout=0, leaky=0.5):
    """Pure-JAX reference for correctness checking."""
    squeeze = x.ndim == 2
    if squeeze:
        x = x[None]
    H = w_hh.shape[0]
    b1 = jnp.asarray(b, jnp.float32).reshape(-1)

    def series(xs):
        def step(h, xt):
            pre = xt @ w_in + h @ w_hh + b1
            h_new = (1.0 - leaky) * h + leaky * jnp.tanh(pre)
            return h_new, h_new

        _, hs = lax.scan(step, jnp.zeros((H,), jnp.float32), xs)
        return hs

    out = jax.vmap(series)(x)[:, washout:, :]
    return out[0] if squeeze else out


if __name__ == "__main__":
    key = jax.random.PRNGKey(0)
    keys = jax.random.split(key, 8)

    # Small shapes: num_series=2, seq_len=8, input_dim=4, hidden=32.
    N, T, D, H = 2, 8, 4, 32

    w_in = jax.random.uniform(keys[0], (D, H), jnp.float32, -1.0, 1.0)
    # Recurrent weights scaled down to keep the reservoir contractive
    # (stand-in for spectral-radius normalization).
    w_hh = 0.1 * jax.random.uniform(keys[1], (H, H), jnp.float32, -1.0, 1.0)
    b = jax.random.uniform(keys[2], (1, H), jnp.float32, -0.1, 0.1)
    x = jax.random.normal(keys[3], (N, T, D), jnp.float32)

    ref = _reference_forward(x, w_in, w_hh, b, washout=0)

    # f32 matmul path, two time chunks (t_chunk=4): exercises the hidden
    # carry across chunks and the pl.when reset.
    out = multi_time_series_forward(x, w_in, w_hh, b, washout=0, t_chunk=4,
                                    matmul_dtype=jnp.float32)
    out = jax.block_until_ready(out)
    assert out.shape == (N, T, H), out.shape
    assert jnp.allclose(out, ref, atol=1e-4), "f32 path mismatch vs reference"

    # Washout path.
    out_w = multi_time_series_forward(x, w_in, w_hh, b, washout=3, t_chunk=4,
                                      matmul_dtype=jnp.float32)
    out_w = jax.block_until_ready(out_w)
    assert out_w.shape == (N, T - 3, H)
    assert jnp.allclose(out_w, ref[:, 3:, :], atol=1e-4)

    # 2-D single-series path, automatic tile selection.
    # TODO(synk): the single-series path uses one series block, so on v7x one
    # TensorCore idles by construction (as in the PyTorch module).
    out2d = multi_time_series_forward(x[0], w_in, w_hh, b, washout=0,
                                      matmul_dtype=jnp.float32)
    out2d = jax.block_until_ready(out2d)
    assert out2d.shape == (T, H)
    assert jnp.allclose(out2d, ref[0], atol=1e-4)

    # Default path: bf16 MXU operands (fast on v5e/v6e/v7x), f32 carry /
    # accumulation / elementwise; auto n_tile / t_chunk.
    out_bf = multi_time_series_forward(x, w_in, w_hh, b, washout=0)
    out_bf = jax.block_until_ready(out_bf)
    assert out_bf.shape == (N, T, H)
    assert jnp.allclose(out_bf, ref, atol=5e-2)

    # bf16 trajectory output (halves HBM writeback and the o VMEM buffers).
    out_b16 = multi_time_series_forward(x, w_in, w_hh, b, washout=0,
                                        out_dtype=jnp.bfloat16)
    out_b16 = jax.block_until_ready(out_b16)
    assert out_b16.dtype == jnp.bfloat16
    assert jnp.allclose(out_b16.astype(jnp.float32), ref, atol=5e-2)

    # Larger config: multiple series blocks (n_tile=8 -> 2 blocks), multiple
    # time chunks with a ragged tail (T=20, t_chunk=8), washout, custom leaky.
    N2, T2, D2, H2 = 10, 20, 3, 40
    w_in2 = jax.random.uniform(keys[4], (D2, H2), jnp.float32, -1.0, 1.0)
    w_hh2 = 0.1 * jax.random.uniform(keys[5], (H2, H2), jnp.float32, -1.0, 1.0)
    b2 = jax.random.uniform(keys[6], (1, H2), jnp.float32, -0.1, 0.1)
    x2 = jax.random.normal(keys[7], (N2, T2, D2), jnp.float32)
    ref2 = _reference_forward(x2, w_in2, w_hh2, b2, washout=5, leaky=0.3)
    out2 = multi_time_series_forward(x2, w_in2, w_hh2, b2, washout=5,
                                     leaky=0.3, n_tile=8, t_chunk=8,
                                     matmul_dtype=jnp.float32)
    out2 = jax.block_until_ready(out2)
    assert out2.shape == (N2, T2 - 5, H2)
    assert jnp.allclose(out2, ref2, atol=1e-4)

    print("KERNEL_OK")
</pallas_src>

<mosaic_0001>
module attributes {stable_mosaic.version = 11 : i64} {
  func.func @kernel(%arg0: i32, %arg1: i32, %arg2: memref<4x8x4xf32, #tpu.memory_space<vmem>>, %arg3: memref<4x128xf32, #tpu.memory_space<vmem>>, %arg4: memref<128x128xf32, #tpu.memory_space<vmem>>, %arg5: memref<1x128xf32, #tpu.memory_space<vmem>>, %arg6: memref<4x8x128xf32, #tpu.memory_space<vmem>>, %arg7: memref<8x128xf32, #tpu.memory_space<vmem>>, %arg8: memref<32x128xf32, #tpu.memory_space<vmem>>) attributes {dimension_semantics = [#tpu.dimension_semantics<parallel>, #tpu.dimension_semantics<arbitrary>], iteration_bounds = array<i64: 1, 2>, scalar_prefetch = 0 : i64, scratch_operands = 2 : i64, tpu.core_type = #tpu.core_type<tc>, window_params = [{transform_indices = @transform_0, window_bounds = array<i64: 4, 8, 4>}, {pipeline_mode = #tpu.pipeline_mode<synchronous>, transform_indices = @transform_1, window_bounds = array<i64: 4, 128>}, {pipeline_mode = #tpu.pipeline_mode<synchronous>, transform_indices = @transform_2, window_bounds = array<i64: 128, 128>}, {pipeline_mode = #tpu.pipeline_mode<synchronous>, transform_indices = @transform_3, window_bounds = array<i64: 1, 128>}, {transform_indices = @transform_4, window_bounds = array<i64: 4, 8, 128>}]} {
    %c0_i32 = arith.constant 0 : i32
    %0 = arith.cmpi eq, %arg1, %c0_i32 : i32
    %1 = arith.extui %0 : i1 to i32
    %c0_i32_0 = arith.constant 0 : i32
    %2 = arith.cmpi ne, %1, %c0_i32_0 : i32
    scf.if %2 {
      %cst_43 = arith.constant 0.000000e+00 : f32
      %78 = vector.broadcast %cst_43 : f32 to vector<8x128xf32>
      %c0_44 = arith.constant 0 : index
      %c0_45 = arith.constant 0 : index
      %79 = vector.load %arg7[%c0_44, %c0_45] : memref<8x128xf32, #tpu.memory_space<vmem>>, vector<8x128xf32>
      tpu.vector_store %arg7[%c0_44, %c0_45], %78 {strides = array<i32>} : memref<8x128xf32, #tpu.memory_space<vmem>>, vector<8x128xf32>,
    } else {
    }
    %c0 = arith.constant 0 : index
    %c0_1 = arith.constant 0 : index
    %3 = vector.load %arg3[%c0, %c0_1] : memref<4x128xf32, #tpu.memory_space<vmem>>, vector<4x128xf32>
    %c0_2 = arith.constant 0 : index
    %c0_3 = arith.constant 0 : index
    %c0_4 = arith.constant 0 : index
    %4 = vector.load %arg2[%c0_2, %c0_3, %c0_4] : memref<4x8x4xf32, #tpu.memory_space<vmem>>, vector<4x8x4xf32>
    %5 = vector.shape_cast %4 : vector<4x8x4xf32> to vector<32x4xf32>
    %cst = arith.constant dense<0.000000e+00> : vector<32x128xf32>
    %6 = tpu.matmul %5, %3, %cst {dimension_numbers = #tpu.dot_dimension_numbers<[1], [0], [0], [1], [0, 0, 1, 1], [], []>} : vector<32x4xf32>, vector<4x128xf32>, vector<32x128xf32> -> vector<32x128xf32>
    %c0_5 = arith.constant 0 : index
    %c0_6 = arith.constant 0 : index
    %7 = vector.load %arg5[%c0_5, %c0_6] : memref<1x128xf32, #tpu.memory_space<vmem>>, vector<1x128xf32>
    %8 = vector.broadcast %7 : vector<1x128xf32> to vector<32x128xf32>
    %9 = arith.addf %6, %8 : vector<32x128xf32>
    %c0_7 = arith.constant 0 : index
    %c0_8 = arith.constant 0 : index
    %10 = vector.load %arg8[%c0_7, %c0_8] : memref<32x128xf32, #tpu.memory_space<vmem>>, vector<32x128xf32>
    tpu.vector_store %arg8[%c0_7, %c0_8], %9 {strides = array<i32>} : memref<32x128xf32, #tpu.memory_space<vmem>>, vector<32x128xf32>,
    %c0_9 = arith.constant 0 : index
    %c0_10 = arith.constant 0 : index
    %11 = vector.load %arg4[%c0_9, %c0_10] : memref<128x128xf32, #tpu.memory_space<vmem>>, vector<128x128xf32>
    %c0_11 = arith.constant 0 : index
    %c0_12 = arith.constant 0 : index
    %12 = vector.load %arg7[%c0_11, %c0_12] : memref<8x128xf32, #tpu.memory_space<vmem>>, vector<8x128xf32>
    %c0_i32_13 = arith.constant 0 : i32
    %c8_i32 = arith.constant 8 : i32
    %13 = arith.muli %c0_i32_13, %c8_i32 : i32
    %14 = tpu.assume_multiple %13, 8 : i32
    %15 = arith.index_cast %14 : i32 to index
    %c0_14 = arith.constant 0 : index
    %16 = vector.load %arg8[%15, %c0_14] : memref<32x128xf32, #tpu.memory_space<vmem>>, vector<8x128xf32>
    %cst_15 = arith.constant dense<0.000000e+00> : vector<8x128xf32>
    %17 = tpu.matmul %12, %11, %cst_15 {dimension_numbers = #tpu.dot_dimension_numbers<[1], [0], [0], [1], [0, 0, 1, 1], [], []>} : vector<8x128xf32>, vector<128x128xf32>, vector<8x128xf32> -> vector<8x128xf32>
    %18 = arith.addf %16, %17 : vector<8x128xf32>
    %cst_16 = arith.constant 5.000000e-01 : f32
    %19 = vector.broadcast %cst_16 : f32 to vector<8x128xf32>
    %20 = arith.mulf %19, %12 : vector<8x128xf32>
    %21 = math.tanh %18 : vector<8x128xf32>
    %cst_17 = arith.constant 5.000000e-01 : f32
    %22 = vector.broadcast %cst_17 : f32 to vector<8x128xf32>
    %23 = arith.mulf %22, %21 : vector<8x128xf32>
    %24 = arith.addf %20, %23 : vector<8x128xf32>
    %25 = arith.index_cast %c0_i32_13 : i32 to index
    %c0_18 = arith.constant 0 : index
    %c0_19 = arith.constant 0 : index
    %26 = vector.load %arg6[%25, %c0_18, %c0_19] : memref<4x8x128xf32, #tpu.memory_space<vmem>>, vector<1x8x128xf32>
    %27 = vector.shape_cast %26 : vector<1x8x128xf32> to vector<8x128xf32>
    %28 = vector.shape_cast %24 : vector<8x128xf32> to vector<1x8x128xf32>
    tpu.vector_store %arg6[%25, %c0_18, %c0_19], %28 {strides = array<i32>} : memref<4x8x128xf32, #tpu.memory_space<vmem>>, vector<1x8x128xf32>,
    %c1_i32 = arith.constant 1 : i32
    %c8_i32_20 = arith.constant 8 : i32
    %29 = arith.muli %c1_i32, %c8_i32_20 : i32
    %30 = tpu.assume_multiple %29, 8 : i32
    %31 = arith.index_cast %30 : i32 to index
    %c0_21 = arith.constant 0 : index
    %32 = vector.load %arg8[%31, %c0_21] : memref<32x128xf32, #tpu.memory_space<vmem>>, vector<8x128xf32>
    %cst_22 = arith.constant dense<0.000000e+00> : vector<8x128xf32>
    %33 = tpu.matmul %24, %11, %cst_22 {dimension_numbers = #tpu.dot_dimension_numbers<[1], [0], [0], [1], [0, 0, 1, 1], [], []>} : vector<8x128xf32>, vector<128x128xf32>, vector<8x128xf32> -> vector<8x128xf32>
    %34 = arith.addf %32, %33 : vector<8x128xf32>
    %cst_23 = arith.constant 5.000000e-01 : f32
    %35 = vector.broadcast %cst_23 : f32 to vector<8x128xf32>
    %36 = arith.mulf %35, %24 : vector<8x128xf32>
    %37 = math.tanh %34 : vector<8x128xf32>
    %cst_24 = arith.constant 5.000000e-01 : f32
    %38 = vector.broadcast %cst_24 : f32 to vector<8x128xf32>
    %39 = arith.mulf %38, %37 : vector<8x128xf32>
    %40 = arith.addf %36, %39 : vector<8x128xf32>
    %41 = arith.index_cast %c1_i32 : i32 to index
    %c0_25 = arith.constant 0 : index
    %c0_26 = arith.constant 0 : index
    %42 = vector.load %arg6[%41, %c0_25, %c0_26] : memref<4x8x128xf32, #tpu.memory_space<vmem>>, vector<1x8x128xf32>
    %43 = vector.shape_cast %42 : vector<1x8x128xf32> to vector<8x128xf32>
    %44 = vector.shape_cast %40 : vector<8x128xf32> to vector<1x8x128xf32>
    tpu.vector_store %arg6[%41, %c0_25, %c0_26], %44 {strides = array<i32>} : memref<4x8x128xf32, #tpu.memory_space<vmem>>, vector<1x8x128xf32>,
    %c2_i32 = arith.constant 2 : i32
    %c8_i32_27 = arith.constant 8 : i32
    %45 = arith.muli %c2_i32, %c8_i32_27 : i32
    %46 = tpu.assume_multiple %45, 8 : i32
    %47 = arith.index_cast %46 : i32 to index
    %c0_28 = arith.constant 0 : index
    %48 = vector.load %arg8[%47, %c0_28] : memref<32x128xf32, #tpu.memory_space<vmem>>, vector<8x128xf32>
    %cst_29 = arith.constant dense<0.000000e+00> : vector<8x128xf32>
    %49 = tpu.matmul %40, %11, %cst_29 {dimension_numbers = #tpu.dot_dimension_numbers<[1], [0], [0], [1], [0, 0, 1, 1], [], []>} : vector<8x128xf32>, vector<128x128xf32>, vector<8x128xf32> -> vector<8x128xf32>
    %50 = arith.addf %48, %49 : vector<8x128xf32>
    %cst_30 = arith.constant 5.000000e-01 : f32
    %51 = vector.broadcast %cst_30 : f32 to vector<8x128xf32>
    %52 = arith.mulf %51, %40 : vector<8x128xf32>
    %53 = math.tanh %50 : vector<8x128xf32>
    %cst_31 = arith.constant 5.000000e-01 : f32
    %54 = vector.broadcast %cst_31 : f32 to vector<8x128xf32>
    %55 = arith.mulf %54, %53 : vector<8x128xf32>
    %56 = arith.addf %52, %55 : vector<8x128xf32>
    %57 = arith.index_cast %c2_i32 : i32 to index
    %c0_32 = arith.constant 0 : index
    %c0_33 = arith.constant 0 : index
    %58 = vector.load %arg6[%57, %c0_32, %c0_33] : memref<4x8x128xf32, #tpu.memory_space<vmem>>, vector<1x8x128xf32>
    %59 = vector.shape_cast %58 : vector<1x8x128xf32> to vector<8x128xf32>
    %60 = vector.shape_cast %56 : vector<8x128xf32> to vector<1x8x128xf32>
    tpu.vector_store %arg6[%57, %c0_32, %c0_33], %60 {strides = array<i32>} : memref<4x8x128xf32, #tpu.memory_space<vmem>>, vector<1x8x128xf32>,
    %c3_i32 = arith.constant 3 : i32
    %c8_i32_34 = arith.constant 8 : i32
    %61 = arith.muli %c3_i32, %c8_i32_34 : i32
    %62 = tpu.assume_multiple %61, 8 : i32
    %63 = arith.index_cast %62 : i32 to index
    %c0_35 = arith.constant 0 : index
    %64 = vector.load %arg8[%63, %c0_35] : memref<32x128xf32, #tpu.memory_space<vmem>>, vector<8x128xf32>
    %cst_36 = arith.constant dense<0.000000e+00> : vector<8x128xf32>
    %65 = tpu.matmul %56, %11, %cst_36 {dimension_numbers = #tpu.dot_dimension_numbers<[1], [0], [0], [1], [0, 0, 1, 1], [], []>} : vector<8x128xf32>, vector<128x128xf32>, vector<8x128xf32> -> vector<8x128xf32>
    %66 = arith.addf %64, %65 : vector<8x128xf32>
    %cst_37 = arith.constant 5.000000e-01 : f32
    %67 = vector.broadcast %cst_37 : f32 to vector<8x128xf32>
    %68 = arith.mulf %67, %56 : vector<8x128xf32>
    %69 = math.tanh %66 : vector<8x128xf32>
    %cst_38 = arith.constant 5.000000e-01 : f32
    %70 = vector.broadcast %cst_38 : f32 to vector<8x128xf32>
    %71 = arith.mulf %70, %69 : vector<8x128xf32>
    %72 = arith.addf %68, %71 : vector<8x128xf32>
    %73 = arith.index_cast %c3_i32 : i32 to index
    %c0_39 = arith.constant 0 : index
    %c0_40 = arith.constant 0 : index
    %74 = vector.load %arg6[%73, %c0_39, %c0_40] : memref<4x8x128xf32, #tpu.memory_space<vmem>>, vector<1x8x128xf32>
    %75 = vector.shape_cast %74 : vector<1x8x128xf32> to vector<8x128xf32>
    %76 = vector.shape_cast %72 : vector<8x128xf32> to vector<1x8x128xf32>
    tpu.vector_store %arg6[%73, %c0_39, %c0_40], %76 {strides = array<i32>} : memref<4x8x128xf32, #tpu.memory_space<vmem>>, vector<1x8x128xf32>,
    %c4_i32 = arith.constant 4 : i32
    %c0_41 = arith.constant 0 : index
    %c0_42 = arith.constant 0 : index
    %77 = vector.load %arg7[%c0_41, %c0_42] : memref<8x128xf32, #tpu.memory_space<vmem>>, vector<8x128xf32>
    tpu.vector_store %arg7[%c0_41, %c0_42], %72 {strides = array<i32>} : memref<8x128xf32, #tpu.memory_space<vmem>>, vector<8x128xf32>,
    return
  }
  func.func @transform_0(%arg0: i32, %arg1: i32) -> (i32, i32, i32) {
    %c0_i32 = arith.constant 0 : i32
    %c0_i32_0 = arith.constant 0 : i32
    return %arg1, %arg0, %c0_i32 : i32, i32, i32
  }
  func.func @transform_1(%arg0: i32, %arg1: i32) -> (i32, i32) {
    %c0_i32 = arith.constant 0 : i32
    %c0_i32_0 = arith.constant 0 : i32
    %c0_i32_1 = arith.constant 0 : i32
    return %c0_i32, %c0_i32_0 : i32, i32
  }
  func.func @transform_2(%arg0: i32, %arg1: i32) -> (i32, i32) {
    %c0_i32 = arith.constant 0 : i32
    %c0_i32_0 = arith.constant 0 : i32
    %c0_i32_1 = arith.constant 0 : i32
    return %c0_i32, %c0_i32_0 : i32, i32
  }
  func.func @transform_3(%arg0: i32, %arg1: i32) -> (i32, i32) {
    %c0_i32 = arith.constant 0 : i32
    %c0_i32_0 = arith.constant 0 : i32
    %c0_i32_1 = arith.constant 0 : i32
    return %c0_i32, %c0_i32_0 : i32, i32
  }
  func.func @transform_4(%arg0: i32, %arg1: i32) -> (i32, i32, i32) {
    %c0_i32 = arith.constant 0 : i32
    %c0_i32_0 = arith.constant 0 : i32
    return %arg1, %arg0, %c0_i32 : i32, i32, i32
  }
}

module attributes {stable_mosaic.version = 11 : i64} {
  func.func @kernel(%arg0: i32, %arg1: i32, %arg2: memref<4x8x4xf32, #tpu.memory_space<vmem>>, %arg3: memref<4x128xf32, #tpu.memory_space<vmem>>, %arg4: memref<128x128xf32, #tpu.memory_space<vmem>>, %arg5: memref<1x128xf32, #tpu.memory_space<vmem>>, %arg6: memref<4x8x128xf32, #tpu.memory_space<vmem>>, %arg7: memref<8x128xf32, #tpu.memory_space<vmem>>, %arg8: memref<32x128xf32, #tpu.memory_space<vmem>>) attributes {dimension_semantics = [#tpu.dimension_semantics<parallel>, #tpu.dimension_semantics<arbitrary>], iteration_bounds = array<i64: 1, 2>, scalar_prefetch = 0 : i64, scratch_operands = 2 : i64, tpu.core_type = #tpu.core_type<tc>, window_params = [{transform_indices = @transform_0, window_bounds = array<i64: 4, 8, 4>}, {pipeline_mode = #tpu.pipeline_mode<synchronous>, transform_indices = @transform_1, window_bounds = array<i64: 4, 128>}, {pipeline_mode = #tpu.pipeline_mode<synchronous>, transform_indices = @transform_2, window_bounds = array<i64: 128, 128>}, {pipeline_mode = #tpu.pipeline_mode<synchronous>, transform_indices = @transform_3, window_bounds = array<i64: 1, 128>}, {transform_indices = @transform_4, window_bounds = array<i64: 4, 8, 128>}]} {
    %c0_i32 = arith.constant 0 : i32
    %0 = arith.cmpi eq, %arg1, %c0_i32 : i32
    %1 = arith.extui %0 : i1 to i32
    %c0_i32_0 = arith.constant 0 : i32
    %2 = arith.cmpi ne, %1, %c0_i32_0 : i32
    scf.if %2 {
      %cst_43 = arith.constant 0.000000e+00 : f32
      %78 = vector.broadcast %cst_43 : f32 to vector<8x128xf32>
      %c0_44 = arith.constant 0 : index
      %c0_45 = arith.constant 0 : index
      %79 = vector.load %arg7[%c0_44, %c0_45] : memref<8x128xf32, #tpu.memory_space<vmem>>, vector<8x128xf32>
      tpu.vector_store %arg7[%c0_44, %c0_45], %78 {strides = array<i32>} : memref<8x128xf32, #tpu.memory_space<vmem>>, vector<8x128xf32>,
    } else {
    }
    %c0 = arith.constant 0 : index
    %c0_1 = arith.constant 0 : index
    %3 = vector.load %arg3[%c0, %c0_1] : memref<4x128xf32, #tpu.memory_space<vmem>>, vector<4x128xf32>
    %c0_2 = arith.constant 0 : index
    %c0_3 = arith.constant 0 : index
    %c0_4 = arith.constant 0 : index
    %4 = vector.load %arg2[%c0_2, %c0_3, %c0_4] : memref<4x8x4xf32, #tpu.memory_space<vmem>>, vector<4x8x4xf32>
    %5 = vector.shape_cast %4 : vector<4x8x4xf32> to vector<32x4xf32>
    %cst = arith.constant dense<0.000000e+00> : vector<32x128xf32>
    %6 = tpu.matmul %5, %3, %cst {dimension_numbers = #tpu.dot_dimension_numbers<[1], [0], [0], [1], [0, 0, 1, 1], [], []>} : vector<32x4xf32>, vector<4x128xf32>, vector<32x128xf32> -> vector<32x128xf32>
    %c0_5 = arith.constant 0 : index
    %c0_6 = arith.constant 0 : index
    %7 = vector.load %arg5[%c0_5, %c0_6] : memref<1x128xf32, #tpu.memory_space<vmem>>, vector<1x128xf32>
    %8 = vector.broadcast %7 : vector<1x128xf32> to vector<32x128xf32>
    %9 = arith.addf %6, %8 : vector<32x128xf32>
    %c0_7 = arith.constant 0 : index
    %c0_8 = arith.constant 0 : index
    %10 = vector.load %arg8[%c0_7, %c0_8] : memref<32x128xf32, #tpu.memory_space<vmem>>, vector<32x128xf32>
    tpu.vector_store %arg8[%c0_7, %c0_8], %9 {strides = array<i32>} : memref<32x128xf32, #tpu.memory_space<vmem>>, vector<32x128xf32>,
    %c0_9 = arith.constant 0 : index
    %c0_10 = arith.constant 0 : index
    %11 = vector.load %arg4[%c0_9, %c0_10] : memref<128x128xf32, #tpu.memory_space<vmem>>, vector<128x128xf32>
    %c0_11 = arith.constant 0 : index
    %c0_12 = arith.constant 0 : index
    %12 = vector.load %arg7[%c0_11, %c0_12] : memref<8x128xf32, #tpu.memory_space<vmem>>, vector<8x128xf32>
    %c0_i32_13 = arith.constant 0 : i32
    %c8_i32 = arith.constant 8 : i32
    %13 = arith.muli %c0_i32_13, %c8_i32 : i32
    %14 = tpu.assume_multiple %13, 8 : i32
    %15 = arith.index_cast %14 : i32 to index
    %c0_14 = arith.constant 0 : index
    %16 = vector.load %arg8[%15, %c0_14] : memref<32x128xf32, #tpu.memory_space<vmem>>, vector<8x128xf32>
    %cst_15 = arith.constant dense<0.000000e+00> : vector<8x128xf32>
    %17 = tpu.matmul %12, %11, %cst_15 {dimension_numbers = #tpu.dot_dimension_numbers<[1], [0], [0], [1], [0, 0, 1, 1], [], []>} : vector<8x128xf32>, vector<128x128xf32>, vector<8x128xf32> -> vector<8x128xf32>
    %18 = arith.addf %16, %17 : vector<8x128xf32>
    %cst_16 = arith.constant 5.000000e-01 : f32
    %19 = vector.broadcast %cst_16 : f32 to vector<8x128xf32>
    %20 = arith.mulf %19, %12 : vector<8x128xf32>
    %21 = math.tanh %18 : vector<8x128xf32>
    %cst_17 = arith.constant 5.000000e-01 : f32
    %22 = vector.broadcast %cst_17 : f32 to vector<8x128xf32>
    %23 = arith.mulf %22, %21 : vector<8x128xf32>
    %24 = arith.addf %20, %23 : vector<8x128xf32>
    %25 = arith.index_cast %c0_i32_13 : i32 to index
    %c0_18 = arith.constant 0 : index
    %c0_19 = arith.constant 0 : index
    %26 = vector.load %arg6[%25, %c0_18, %c0_19] : memref<4x8x128xf32, #tpu.memory_space<vmem>>, vector<1x8x128xf32>
    %27 = vector.shape_cast %26 : vector<1x8x128xf32> to vector<8x128xf32>
    %28 = vector.shape_cast %24 : vector<8x128xf32> to vector<1x8x128xf32>
    tpu.vector_store %arg6[%25, %c0_18, %c0_19], %28 {strides = array<i32>} : memref<4x8x128xf32, #tpu.memory_space<vmem>>, vector<1x8x128xf32>,
    %c1_i32 = arith.constant 1 : i32
    %c8_i32_20 = arith.constant 8 : i32
    %29 = arith.muli %c1_i32, %c8_i32_20 : i32
    %30 = tpu.assume_multiple %29, 8 : i32
    %31 = arith.index_cast %30 : i32 to index
    %c0_21 = arith.constant 0 : index
    %32 = vector.load %arg8[%31, %c0_21] : memref<32x128xf32, #tpu.memory_space<vmem>>, vector<8x128xf32>
    %cst_22 = arith.constant dense<0.000000e+00> : vector<8x128xf32>
    %33 = tpu.matmul %24, %11, %cst_22 {dimension_numbers = #tpu.dot_dimension_numbers<[1], [0], [0], [1], [0, 0, 1, 1], [], []>} : vector<8x128xf32>, vector<128x128xf32>, vector<8x128xf32> -> vector<8x128xf32>
    %34 = arith.addf %32, %33 : vector<8x128xf32>
    %cst_23 = arith.constant 5.000000e-01 : f32
    %35 = vector.broadcast %cst_23 : f32 to vector<8x128xf32>
    %36 = arith.mulf %35, %24 : vector<8x128xf32>
    %37 = math.tanh %34 : vector<8x128xf32>
    %cst_24 = arith.constant 5.000000e-01 : f32
    %38 = vector.broadcast %cst_24 : f32 to vector<8x128xf32>
    %39 = arith.mulf %38, %37 : vector<8x128xf32>
    %40 = arith.addf %36, %39 : vector<8x128xf32>
    %41 = arith.index_cast %c1_i32 : i32 to index
    %c0_25 = arith.constant 0 : index
    %c0_26 = arith.constant 0 : index
    %42 = vector.load %arg6[%41, %c0_25, %c0_26] : memref<4x8x128xf32, #tpu.memory_space<vmem>>, vector<1x8x128xf32>
    %43 = vector.shape_cast %42 : vector<1x8x128xf32> to vector<8x128xf32>
    %44 = vector.shape_cast %40 : vector<8x128xf32> to vector<1x8x128xf32>
    tpu.vector_store %arg6[%41, %c0_25, %c0_26], %44 {strides = array<i32>} : memref<4x8x128xf32, #tpu.memory_space<vmem>>, vector<1x8x128xf32>,
    %c2_i32 = arith.constant 2 : i32
    %c8_i32_27 = arith.constant 8 : i32
    %45 = arith.muli %c2_i32, %c8_i32_27 : i32
    %46 = tpu.assume_multiple %45, 8 : i32
    %47 = arith.index_cast %46 : i32 to index
    %c0_28 = arith.constant 0 : index
    %48 = vector.load %arg8[%47, %c0_28] : memref<32x128xf32, #tpu.memory_space<vmem>>, vector<8x128xf32>
    %cst_29 = arith.constant dense<0.000000e+00> : vector<8x128xf32>
    %49 = tpu.matmul %40, %11, %cst_29 {dimension_numbers = #tpu.dot_dimension_numbers<[1], [0], [0], [1], [0, 0, 1, 1], [], []>} : vector<8x128xf32>, vector<128x128xf32>, vector<8x128xf32> -> vector<8x128xf32>
    %50 = arith.addf %48, %49 : vector<8x128xf32>
    %cst_30 = arith.constant 5.000000e-01 : f32
    %51 = vector.broadcast %cst_30 : f32 to vector<8x128xf32>
    %52 = arith.mulf %51, %40 : vector<8x128xf32>
    %53 = math.tanh %50 : vector<8x128xf32>
    %cst_31 = arith.constant 5.000000e-01 : f32
    %54 = vector.broadcast %cst_31 : f32 to vector<8x128xf32>
    %55 = arith.mulf %54, %53 : vector<8x128xf32>
    %56 = arith.addf %52, %55 : vector<8x128xf32>
    %57 = arith.index_cast %c2_i32 : i32 to index
    %c0_32 = arith.constant 0 : index
    %c0_33 = arith.constant 0 : index
    %58 = vector.load %arg6[%57, %c0_32, %c0_33] : memref<4x8x128xf32, #tpu.memory_space<vmem>>, vector<1x8x128xf32>
    %59 = vector.shape_cast %58 : vector<1x8x128xf32> to vector<8x128xf32>
    %60 = vector.shape_cast %56 : vector<8x128xf32> to vector<1x8x128xf32>
    tpu.vector_store %arg6[%57, %c0_32, %c0_33], %60 {strides = array<i32>} : memref<4x8x128xf32, #tpu.memory_space<vmem>>, vector<1x8x128xf32>,
    %c3_i32 = arith.constant 3 : i32
    %c8_i32_34 = arith.constant 8 : i32
    %61 = arith.muli %c3_i32, %c8_i32_34 : i32
    %62 = tpu.assume_multiple %61, 8 : i32
    %63 = arith.index_cast %62 : i32 to index
    %c0_35 = arith.constant 0 : index
    %64 = vector.load %arg8[%63, %c0_35] : memref<32x128xf32, #tpu.memory_space<vmem>>, vector<8x128xf32>
    %cst_36 = arith.constant dense<0.000000e+00> : vector<8x128xf32>
    %65 = tpu.matmul %56, %11, %cst_36 {dimension_numbers = #tpu.dot_dimension_numbers<[1], [0], [0], [1], [0, 0, 1, 1], [], []>} : vector<8x128xf32>, vector<128x128xf32>, vector<8x128xf32> -> vector<8x128xf32>
    %66 = arith.addf %64, %65 : vector<8x128xf32>
    %cst_37 = arith.constant 5.000000e-01 : f32
    %67 = vector.broadcast %cst_37 : f32 to vector<8x128xf32>
    %68 = arith.mulf %67, %56 : vector<8x128xf32>
    %69 = math.tanh %66 : vector<8x128xf32>
    %cst_38 = arith.constant 5.000000e-01 : f32
    %70 = vector.broadcast %cst_38 : f32 to vector<8x128xf32>
    %71 = arith.mulf %70, %69 : vector<8x128xf32>
    %72 = arith.addf %68, %71 : vector<8x128xf32>
    %73 = arith.index_cast %c3_i32 : i32 to index
    %c0_39 = arith.constant 0 : index
    %c0_40 = arith.constant 0 : index
    %74 = vector.load %arg6[%73, %c0_39, %c0_40] : memref<4x8x128xf32, #tpu.memory_space<vmem>>, vector<1x8x128xf32>
    %75 = vector.shape_cast %74 : vector<1x8x128xf32> to vector<8x128xf32>
    %76 = vector.shape_cast %72 : vector<8x128xf32> to vector<1x8x128xf32>
    tpu.vector_store %arg6[%73, %c0_39, %c0_40], %76 {strides = array<i32>} : memref<4x8x128xf32, #tpu.memory_space<vmem>>, vector<1x8x128xf32>,
    %c4_i32 = arith.constant 4 : i32
    %c0_41 = arith.constant 0 : index
    %c0_42 = arith.constant 0 : index
    %77 = vector.load %arg7[%c0_41, %c0_42] : memref<8x128xf32, #tpu.memory_space<vmem>>, vector<8x128xf32>
    tpu.vector_store %arg7[%c0_41, %c0_42], %72 {strides = array<i32>} : memref<8x128xf32, #tpu.memory_space<vmem>>, vector<8x128xf32>,
    return
  }
  func.func @transform_0(%arg0: i32, %arg1: i32) -> (i32, i32, i32) {
    %c0_i32 = arith.constant 0 : i32
    %c0_i32_0 = arith.constant 0 : i32
    return %arg1, %arg0, %c0_i32 : i32, i32, i32
  }
  func.func @transform_1(%arg0: i32, %arg1: i32) -> (i32, i32) {
    %c0_i32 = arith.constant 0 : i32
    %c0_i32_0 = arith.constant 0 : i32
    %c0_i32_1 = arith.constant 0 : i32
    return %c0_i32, %c0_i32_0 : i32, i32
  }
  func.func @transform_2(%arg0: i32, %arg1: i32) -> (i32, i32) {
    %c0_i32 = arith.constant 0 : i32
    %c0_i32_0 = arith.constant 0 : i32
    %c0_i32_1 = arith.constant 0 : i32
    return %c0_i32, %c0_i32_0 : i32, i32
  }
  func.func @transform_3(%arg0: i32, %arg1: i32) -> (i32, i32) {
    %c0_i32 = arith.constant 0 : i32
    %c0_i32_0 = arith.constant 0 : i32
    %c0_i32_1 = arith.constant 0 : i32
    return %c0_i32, %c0_i32_0 : i32, i32
  }
  func.func @transform_4(%arg0: i32, %arg1: i32) -> (i32, i32, i32) {
    %c0_i32 = arith.constant 0 : i32
    %c0_i32_0 = arith.constant 0 : i32
    return %arg1, %arg0, %c0_i32 : i32, i32, i32
  }
}

</mosaic_0001>

<llo_original>
// kernel: tpu_custom_call.1
$region0: #{tpu_custom_call.1}
  #allocation0 [shape = 'u32[]', space=smem, size = 0x4, offset = 0x4, fixed_abs, tag = 'smem constant byte address 0x4 - core index']
  #allocation1 [shape = 'u32[144,128]{1,0:T(1,128)}', space=vmem, size = 0x12000, scoped, tag = 'internal scratch']
  #allocation2 [shape = 'f32[8,128]{1,0:T(8,128)}', space=vmem, size = 0x1000, scoped, tag = 'scratch operand']
  #allocation3 [shape = 'f32[32,128]{1,0:T(8,128)}', space=vmem, size = 0x4000, scoped, tag = 'scratch operand']
  %s0 = inlined_call_operand.vmem [shape: f32[8,8,4], index: 0, kind: input, shape index: {}]
  %s1 = inlined_call_operand.vmem [shape: f32[4,128], index: 1, kind: input, shape index: {}]
  %s2 = inlined_call_operand.hbm [shape: f32[128,128], index: 2, kind: input, shape index: {}]
  %s3 = inlined_call_operand.vmem [shape: f32[1,128], index: 3, kind: input, shape index: {}]
  %s4 = inlined_call_operand.hbm [shape: f32[8,8,128], index: 4, kind: output, shape index: {}]
  %s5 = sld [smem:[#allocation0]]
  $region57: #{tpu_custom_call.1} parent=0
    _
  %s7 = ssub.s32 1, %s5
  %s8 = scalar_select 0, %s7, %s5
  $region1: #{tpu_custom_call.1} parent=0
    #allocation4 [shape = 'u8[65536]{0}', space=vmem, size = 0x10000, scoped, tag = 'input window, operand 2, single buffered']
    #allocation5 [shape = 's32[2]{0}', space=sflag, size = 0x8, scoped, tag = 'scoped memory for tpu_custom_call.1']
    #allocation6 [shape = 's32[2]{0}', space=sflag, size = 0x8, scoped, tag = 'scoped memory for tpu_custom_call.1']
    #allocation7 [shape = 'u8[32768]{0}', space=vmem, size = 0x8000, scoped, tag = 'output window, operand 0']
    %9 = vsyncpa [#allocation5], 0
    %10 = vsyncpa [#allocation6], 0
    %s11 = scalar_lea.sflag [#allocation6], 1
    %12 = vsyncpa %s11, 0
    loop: start=0, step=1, limit=4
    $region2: #{tpu_custom_call.1} parent=1 // loop_pre_header
      _
    $region3: #{tpu_custom_call.1} parent=1 // loop_header
      %s14 = sphi 0, %s18
      %p15 = scmp.ge.s32.totalorder %s14, 4
      %s21 = sphi 0, %s33
      %s22 = sphi 0, %s29
      %s23 = sphi 0, %s21
      %s24 = sphi 0, %s22
      %s25 = sphi 0, %s23
      %s26 = sphi 0, %s24
      %s38 = sphi 0, %s40
      %s41 = sphi 0, %s38
      %s42 = sphi 0, %s41
      %s58 = sphi 0, %s42
      %s62 = sphi 0, %s62
      %s64 = sphi 0, %s62
      %s65 = sphi 0, %s64
      %s79 = sphi 0, %s65
      %s83 = sphi 0, %s83
      %s85 = sphi 0, %s83
      %s86 = sphi 0, %s85
      %s100 = sphi 0, %s86
      %s104 = sphi 0, %s104
      %s106 = sphi 0, %s104
      %s107 = sphi 0, %s106
      %s121 = sphi 0, %s107
      %s129 = sphi 0, %s131
      %s132 = sphi 0, %s129
      %s133 = sphi 0, %s132
      %s149 = sphi 0, %s133
    $region4: #{tpu_custom_call.1} parent=1 // loop_header_branch
      %17 = sbr.rel (%p15) target = $region8
    $region5: #{tpu_custom_call.1} parent=1 // loop_body
      %s19 = ssub.s32 %s14, 1
      %s20 = ssub.s32 %s14, 2
      %s27 = sadd.s32 1, %s22
      %p28 = scmp.ge.s32.totalorder %s27, 2
      %s29 = scalar_select %p28, 0, %s27
      %s30 = sadd.s32 1, %s21
      %s31 = scalar_select %p28, %s30, %s21
      %p32 = scmp.ge.s32.totalorder %s31, 1
      %s33 = scalar_select %p32, 0, %s31
      %s34 = ssub.s32 %s22, %s29
      %s35 = ssub.s32 %s21, %s33
      %s36 = sor.u32 %s34, %s35
      %p37 = scmp.eq.s32.totalorder %s36, 0
      %s39 = sadd.s32 %s38, 1
      %s40 = scalar_select %p37, %s38, %s39
      %p43 = pneg %p37
      %p44 = scmp.eq.s32.totalorder %s14, 1
      %p45 = por %p43, %p44
      %p46 = scmp.ne.s32.totalorder %s38, %s41
      %p47 = scmp.eq.s32.totalorder %s14, 0
      %p48 = por %p46, %p47
      %p49 = scmp.ne.s32.totalorder %s38, %s41
      %p50 = scmp.eq.s32.totalorder %s19, 1
      %p51 = por %p49, %p50
      %p52 = scmp.ne.s32.totalorder %s41, %s42
      %p53 = scmp.eq.s32.totalorder %s19, 0
      %p54 = por %p52, %p53
      %p55 = scmp.ne.s32.totalorder %s41, %s42
      %p56 = scmp.eq.s32.totalorder %s20, 1
      %p57 = por %p55, %p56
      %p59 = scmp.ne.s32.totalorder %s42, %s58
      %p60 = scmp.eq.s32.totalorder %s20, 0
      %p61 = por %p59, %p60
      %s63 = sadd.s32 %s62, 1
      %p66 = scmp.eq.s32.totalorder %s14, 1
      %p67 = scmp.ne.s32.totalorder %s62, %s64
      %p68 = scmp.eq.s32.totalorder %s14, 0
      %p69 = por %p67, %p68
      %p70 = scmp.ne.s32.totalorder %s62, %s64
      %p71 = scmp.eq.s32.totalorder %s19, 1
      %p72 = por %p70, %p71
      %p73 = scmp.ne.s32.totalorder %s64, %s65
      %p74 = scmp.eq.s32.totalorder %s19, 0
      %p75 = por %p73, %p74
      %p76 = scmp.ne.s32.totalorder %s64, %s65
      %p77 = scmp.eq.s32.totalorder %s20, 1
      %p78 = por %p76, %p77
      %p80 = scmp.ne.s32.totalorder %s65, %s79
      %p81 = scmp.eq.s32.totalorder %s20, 0
      %p82 = por %p80, %p81
      %s84 = sadd.s32 %s83, 1
      %p87 = scmp.eq.s32.totalorder %s14, 1
      %p88 = scmp.ne.s32.totalorder %s83, %s85
      %p89 = scmp.eq.s32.totalorder %s14, 0
      %p90 = por %p88, %p89
      %p91 = scmp.ne.s32.totalorder %s83, %s85
      %p92 = scmp.eq.s32.totalorder %s19, 1
      %p93 = por %p91, %p92
      %p94 = scmp.ne.s32.totalorder %s85, %s86
      %p95 = scmp.eq.s32.totalorder %s19, 0
      %p96 = por %p94, %p95
      %p97 = scmp.ne.s32.totalorder %s85, %s86
      %p98 = scmp.eq.s32.totalorder %s20, 1
      %p99 = por %p97, %p98
      %p101 = scmp.ne.s32.totalorder %s86, %s100
      %p102 = scmp.eq.s32.totalorder %s20, 0
      %p103 = por %p101, %p102
      %s105 = sadd.s32 %s104, 1
      %p108 = scmp.eq.s32.totalorder %s14, 1
      %p109 = scmp.ne.s32.totalorder %s104, %s106
      %p110 = scmp.eq.s32.totalorder %s14, 0
      %p111 = por %p109, %p110
      %p112 = scmp.ne.s32.totalorder %s104, %s106
      %p113 = scmp.eq.s32.totalorder %s19, 1
      %p114 = por %p112, %p113
      %p115 = scmp.ne.s32.totalorder %s106, %s107
      %p116 = scmp.eq.s32.totalorder %s19, 0
      %p117 = por %p115, %p116
      %p118 = scmp.ne.s32.totalorder %s106, %s107
      %p119 = scmp.eq.s32.totalorder %s20, 1
      %p120 = por %p118, %p119
      %p122 = scmp.ne.s32.totalorder %s107, %s121
      %p123 = scmp.eq.s32.totalorder %s20, 0
      %p124 = por %p122, %p123
      %s125 = ssub.s32 %s22, %s29
      %s126 = ssub.s32 %s21, %s33
      %s127 = sor.u32 %s125, %s126
      %p128 = scmp.eq.s32.totalorder %s127, 0
      %s130 = sadd.s32 %s129, 1
      %s131 = scalar_select %p128, %s129, %s130
      %p134 = pneg %p128
      %p135 = scmp.eq.s32.totalorder %s14, 1
      %p136 = por %p134, %p135
      %p137 = scmp.ne.s32.totalorder %s129, %s132
      %p138 = scmp.eq.s32.totalorder %s14, 0
      %p139 = por %p137, %p138
      %p140 = scmp.ne.s32.totalorder %s129, %s132
      %p141 = scmp.eq.s32.totalorder %s19, 1
      %p142 = por %p140, %p141
      %p143 = scmp.ne.s32.totalorder %s132, %s133
      %p144 = scmp.eq.s32.totalorder %s19, 0
      %p145 = por %p143, %p144
      %p146 = scmp.ne.s32.totalorder %s132, %s133
      %p147 = scmp.eq.s32.totalorder %s20, 1
      %p148 = por %p146, %p147
      %p150 = scmp.ne.s32.totalorder %s133, %s149
      %p151 = scmp.eq.s32.totalorder %s20, 0
      %p152 = por %p150, %p151
      %p153 = scmp.le.s32.totalorder 1, %s14
      %p154 = scmp.lt.s32.totalorder %s14, 3
      %p155 = pnand %p153, %p154
      %p156 = pneg %p155
      // Predicated region
      $region9: #{tpu_custom_call.1} parent=5 // pred_check
        _
      $region10: #{tpu_custom_call.1} parent=5 // pred_check_branch
        %158 = sbr.rel (%p155) target = $region12
      $region11: #{tpu_custom_call.1} parent=5 // pred_region
        %s159 = ssub.s32 %s14, 1
        // Predicated region
        $region13: #{tpu_custom_call.1} parent=11 // pred_check
          %p160 = pneg %p75
        $region14: #{tpu_custom_call.1} parent=11 // pred_check_branch
          %162 = sbr.rel (%p160) target = $region16
        $region15: #{tpu_custom_call.1} parent=11 // pred_region
          _
        $region16: #{tpu_custom_call.1} parent=11 // pred_fallthru
          _
        // Predicated region
        $region17: #{tpu_custom_call.1} parent=11 // pred_check
          %p163 = pneg %p96
        $region18: #{tpu_custom_call.1} parent=11 // pred_check_branch
          %165 = sbr.rel (%p163) target = $region20
        $region19: #{tpu_custom_call.1} parent=11 // pred_region
          %s167 = ssub.s32 2048, 2048
          %168 = vsyncadd [#allocation5], %s167
          %s169 = sshll.u32 [#allocation4], 4
          %s170 = int_to_ptr.vmem [resolvable:$true] %s169
          %175 = dma.hbm_to_vmem [thread:$0]  %s2, 2048, %s170, [#allocation5], 128, 128, 8
        $region20: #{tpu_custom_call.1} parent=11 // pred_fallthru
          _
        // Predicated region
        $region21: #{tpu_custom_call.1} parent=11 // pred_check
          %p176 = pneg %p117
        $region22: #{tpu_custom_call.1} parent=11 // pred_check_branch
          %178 = sbr.rel (%p176) target = $region24
        $region23: #{tpu_custom_call.1} parent=11 // pred_region
          _
        $region24: #{tpu_custom_call.1} parent=11 // pred_fallthru
          _
      $region12: #{tpu_custom_call.1} parent=5 // pred_fallthru
        _
      %p179 = scmp.lt.s32.totalorder %s14, 2
      // Predicated region
      $region25: #{tpu_custom_call.1} parent=5 // pred_check
        %p180 = pneg %p179
      $region26: #{tpu_custom_call.1} parent=5 // pred_check_branch
        %182 = sbr.rel (%p180) target = $region28
      $region27: #{tpu_custom_call.1} parent=5 // pred_region
        // Predicated region
        $region29: #{tpu_custom_call.1} parent=27 // pred_check
          %p183 = pneg %p48
        $region30: #{tpu_custom_call.1} parent=27 // pred_check_branch
          %185 = sbr.rel (%p183) target = $region32
        $region31: #{tpu_custom_call.1} parent=27 // pred_region
          %s186 = smul.u32 4, %s22
          %p187 = scmp.lt.s32.totalorder %s186, 7
          %s188 = scalar_select %p187, %s186, 7
          %p189 = scmp.lt.s32.totalorder %s21, 0
          %s190 = scalar_select %p189, %s21, 0
          %s191 = sadd.s32 %s190, %s188
          %s192 = smul.addr %s191, 8
          %s193 = scalar_lea.vmem %s0, %s192
          %s194 = smul.u32 4, %s22
        $region32: #{tpu_custom_call.1} parent=27 // pred_fallthru
          _
      $region28: #{tpu_custom_call.1} parent=5 // pred_fallthru
        _
      %p195 = scmp.le.s32.totalorder 1, %s14
      %p196 = scmp.lt.s32.totalorder %s14, 3
      %p197 = pnand %p195, %p196
      %p198 = pneg %p197
      // Predicated region
      $region33: #{tpu_custom_call.1} parent=5 // pred_check
        _
      $region34: #{tpu_custom_call.1} parent=5 // pred_check_branch
        %200 = sbr.rel (%p197) target = $region36
      $region35: #{tpu_custom_call.1} parent=5 // pred_region
        %s201 = ssub.s32 %s14, 1
        // Predicated region
        $region37: #{tpu_custom_call.1} parent=35 // pred_check
          %p202 = pneg %p96
        $region38: #{tpu_custom_call.1} parent=35 // pred_check_branch
          %204 = sbr.rel (%p202) target = $region40
        $region39: #{tpu_custom_call.1} parent=35 // pred_region
          %205 = dma.done [#allocation5], 2048
        $region40: #{tpu_custom_call.1} parent=35 // pred_fallthru
          _
        %s206 = smul.u32 4, %s24
        %p207 = scmp.lt.s32.totalorder %s206, 7
        %s208 = scalar_select %p207, %s206, 7
        %p209 = scmp.lt.s32.totalorder %s23, 0
        %s210 = scalar_select %p209, %s23, 0
        %s211 = sadd.s32 %s210, %s208
        %s212 = smul.addr %s211, 8
        %s213 = scalar_lea.vmem %s0, %s212
        %p214 = pneg %p54
        %p215 = pneg %p51
        %p216 = pneg %p75
        %p217 = pneg %p72
        %p218 = pneg %p96
        %p219 = pneg %p93
        %p220 = pneg %p117
        %p221 = pneg %p114
        %p222 = pneg %p145
        %p223 = pneg %p142
        %s224 = sand.u32 %s132, 1
        %s225 = scalar_lea.sflag [#allocation6], %s224
        %s226 = sand.u32 %s132, 1
        %s227 = smul.addr %s226, 32
        %s228 = scalar_lea.vmem [#allocation7], %s227
        %s229 = smul.u32 4, %s24
        %p230 = scmp.lt.s32.totalorder %s229, 7
        %s231 = scalar_select %p230, %s229, 7
        %p232 = scmp.lt.s32.totalorder %s23, 0
        %s233 = scalar_select %p232, %s23, 0
        %s234 = sadd.s32 %s233, %s231
        %s235 = smul.addr %s234, 8
        %s236 = scalar_lea.vmem %s0, %s235
        %s237 = smul.u32 4, %s24
        %s238 = smul.u32 4, %s24
        %p239 = scmp.eq.s32.totalorder %s24, 0
        // Predicated region
        $region41: #{tpu_custom_call.1} parent=35 // pred_check
          %p240 = pneg %p239
        $region42: #{tpu_custom_call.1} parent=35 // pred_check_branch
          %242 = sbr.rel (%p240) target = $region44
        $region43: #{tpu_custom_call.1} parent=35 // pred_region
          %243 = vst [vmem:[#allocation2] sm:$0xff] 0.0
        $region44: #{tpu_custom_call.1} parent=35 // pred_fallthru
          _
        %v244 = vld [vmem:[%s1] sm:$0xf]
        %v245 = vld [vmem:[%s236] sm:$0xff]
        %v246 = vld [vmem:[%s236 + $0x8] sm:$0xff]
        %v247 = vld [vmem:[%s236 + $0x10] sm:$0xff]
        %v248 = vld [vmem:[%s236 + $0x18] sm:$0xff]
        %v249 = vld [vmem:[%s3] sm:$0x1]
        %v251 = vlaneseq
        %v252 = vshrl.u32 %v251, 7
        %v253 = vsub.s32 0, %v252
        %v254 = vrot.slane %v249, %v253
        %vm256 = vcmask 31744
        %v258 = vsel %vm256, %v245, 0
        %v261 = vsel %vm256, %v246, 0
        %v264 = vsel %vm256, %v247, 0
        %v267 = vsel %vm256, %v248, 0
        %vm269 = vcmask 1043456
        %v271 = vsel %vm269, %v244, 0
        %273 = vmatprep.subr.mxu0 0.0
        %274 = vmatpush1.msra.mxu0 %v271
        %275 = vmatprep.subr.mxu0 0.0
        %276 = vmatpush1.msra.mxu0 0.0
        %277 = vmatprep.subr.mxu0 0.0
        %278 = vmatpush1.msra.mxu0 0.0
        %279 = vmatprep.subr.mxu0 0.0
        %280 = vmatpush1.msra.mxu0 0.0
        %281 = vmatprep.subr.mxu0 0.0
        %282 = vmatpush1.msra.mxu0 0.0
        %283 = vmatprep.subr.mxu0 0.0
        %284 = vmatpush1.msra.mxu0 0.0
        %285 = vmatprep.subr.mxu0 0.0
        %286 = vmatpush1.msra.mxu0 0.0
        %287 = vmatprep.subr.mxu0 0.0
        %288 = vmatpush1.msra.mxu0 0.0
        %289 = vmatprep.subr.mxu0 0.0
        %290 = vmatpush1.msra.mxu0 0.0
        %291 = vmatprep.subr.mxu0 0.0
        %292 = vmatpush1.msra.mxu0 0.0
        %293 = vmatprep.subr.mxu0 0.0
        %294 = vmatpush1.msra.mxu0 0.0
        %295 = vmatprep.subr.mxu0 0.0
        %296 = vmatpush1.msra.mxu0 0.0
        %297 = vmatprep.subr.mxu0 0.0
        %298 = vmatpush1.msra.mxu0 0.0
        %299 = vmatprep.subr.mxu0 0.0
        %300 = vmatpush1.msra.mxu0 0.0
        %301 = vmatprep.subr.mxu0 0.0
        %302 = vmatpush1.msra.mxu0 0.0
        %303 = vmatprep.subr.mxu0 0.0
        %304 = vmatpush1.msra.mxu0 0.0
        %305 = vmatprep.subr.mxu0 0.0
        %306 = vmatpush1.msra.mxu0 0.0
        %307 = vmatprep.subr.mxu0 0.0
        %308 = vmatpush1.msra.mxu0 0.0
        %309 = vmatprep.subr.mxu0 0.0
        %310 = vmatpush1.msra.mxu0 0.0
        %311 = vmatprep.subr.mxu0 0.0
        %312 = vmatpush1.msra.mxu0 0.0
        %313 = vmatprep.subr.mxu0 0.0
        %314 = vmatpush1.msra.mxu0 0.0
        %315 = vmatprep.subr.mxu0 0.0
        %316 = vmatpush1.msra.mxu0 0.0
        %317 = vmatprep.subr.mxu0 0.0
        %318 = vmatpush1.msra.mxu0 0.0
        %319 = vmatprep.subr.mxu0 0.0
        %320 = vmatpush1.msra.mxu0 0.0
        %321 = vmatprep.subr.mxu0 0.0
        %322 = vmatpush1.msra.mxu0 0.0
        %323 = vmatprep.subr.mxu0 0.0
        %324 = vmatpush1.msra.mxu0 0.0
        %325 = vmatprep.subr.mxu0 0.0
        %326 = vmatpush1.msra.mxu0 0.0
        %327 = vmatprep.subr.mxu0 0.0
        %328 = vmatpush1.msra.mxu0 0.0
        %329 = vmatprep.subr.mxu0 0.0
        %330 = vmatpush1.msra.mxu0 0.0
        %331 = vmatprep.subr.mxu0 0.0
        %332 = vmatpush1.msra.mxu0 0.0
        %333 = vmatprep.subr.mxu0 0.0
        %334 = vmatpush1.msra.mxu0 0.0
        %335 = vmatprep.subr.mxu0 0.0
        %336 = vmatpush1.msra.mxu0 0.0
        %337 = vmatprep.mubr.f32.mxu0 0.0
        %338 = vmatmul.mubr.f32.gmra.mrb[0].mxu0 %v258
        %v339 = vpop.f32.mrb[0].mxu0
        %v340 = vadd.f32 %v254, %v339
        %v341 = vpop.f32.mrb[0].mxu0
        %342 = vmatprep.mubr.f32.mxu0 0.0
        %343 = vmatmul.mubr.f32.gmra.mrb[0].mxu0 %v261
        %v344 = vpop.f32.mrb[0].mxu0
        %v345 = vadd.f32 %v254, %v344
        %v346 = vpop.f32.mrb[0].mxu0
        %347 = vmatprep.mubr.f32.mxu0 0.0
        %348 = vmatmul.mubr.f32.gmra.mrb[0].mxu0 %v264
        %v349 = vpop.f32.mrb[0].mxu0
        %v350 = vadd.f32 %v254, %v349
        %v351 = vpop.f32.mrb[0].mxu0
        %352 = vmatprep.mubr.f32.mxu0 0.0
        %353 = vmatmul.mubr.f32.gmra.mrb[0].mxu0 %v267
        %v354 = vpop.f32.mrb[0].mxu0
        %v355 = vadd.f32 %v254, %v354
        %v356 = vpop.f32.mrb[0].mxu0
        %357 = vdwg.mxu0
        %358 = vst [vmem:[#allocation3] sm:$0xff] %v340
        %359 = vst [vmem:[#allocation3 + $0x8] sm:$0xff] %v345
        %360 = vst [vmem:[#allocation3 + $0x10] sm:$0xff] %v350
        %361 = vst [vmem:[#allocation3 + $0x18] sm:$0xff] %v355
        %v362 = vld [vmem:[#allocation4] sm:$0xff]
        %v363 = vld [vmem:[#allocation4 + $0x8] sm:$0xff]
        %v364 = vld [vmem:[#allocation4 + $0x10] sm:$0xff]
        %v365 = vld [vmem:[#allocation4 + $0x18] sm:$0xff]
        %v366 = vld [vmem:[#allocation4 + $0x20] sm:$0xff]
        %v367 = vld [vmem:[#allocation4 + $0x28] sm:$0xff]
        %v368 = vld [vmem:[#allocation4 + $0x30] sm:$0xff]
        %v369 = vld [vmem:[#allocation4 + $0x38] sm:$0xff]
        %v370 = vld [vmem:[#allocation4 + $0x40] sm:$0xff]
        %v371 = vld [vmem:[#allocation4 + $0x48] sm:$0xff]
        %v372 = vld [vmem:[#allocation4 + $0x50] sm:$0xff]
        %v373 = vld [vmem:[#allocation4 + $0x58] sm:$0xff]
        %v374 = vld [vmem:[#allocation4 + $0x60] sm:$0xff]
        %v375 = vld [vmem:[#allocation4 + $0x68] sm:$0xff]
        %v376 = vld [vmem:[#allocation4 + $0x70] sm:$0xff]
        %v377 = vld [vmem:[#allocation4 + $0x78] sm:$0xff]
        %v378 = vld [vmem:[#allocation2] sm:$0xff]
        %v379 = vld [vmem:[#allocation3] sm:$0xff]
        %380 = vmatprep.subr.mxu0 0.0
        %381 = vmatpush1.msra.mxu0 %v362
        %382 = vmatprep.subr.mxu0 0.0
        %383 = vmatpush1.msra.mxu0 %v363
        %384 = vmatprep.subr.mxu0 0.0
        %385 = vmatpush1.msra.mxu0 %v364
        %386 = vmatprep.subr.mxu0 0.0
        %387 = vmatpush1.msra.mxu0 %v365
        %388 = vmatprep.subr.mxu0 0.0
        %389 = vmatpush1.msra.mxu0 %v366
        %390 = vmatprep.subr.mxu0 0.0
        %391 = vmatpush1.msra.mxu0 %v367
        %392 = vmatprep.subr.mxu0 0.0
        %393 = vmatpush1.msra.mxu0 %v368
        %394 = vmatprep.subr.mxu0 0.0
        %395 = vmatpush1.msra.mxu0 %v369
        %396 = vmatprep.subr.mxu0 0.0
        %397 = vmatpush1.msra.mxu0 %v370
        %398 = vmatprep.subr.mxu0 0.0
        %399 = vmatpush1.msra.mxu0 %v371
        %400 = vmatprep.subr.mxu0 0.0
        %401 = vmatpush1.msra.mxu0 %v372
        %402 = vmatprep.subr.mxu0 0.0
        %403 = vmatpush1.msra.mxu0 %v373
        %404 = vmatprep.subr.mxu0 0.0
        %405 = vmatpush1.msra.mxu0 %v374
        %406 = vmatprep.subr.mxu0 0.0
        %407 = vmatpush1.msra.mxu0 %v375
        %408 = vmatprep.subr.mxu0 0.0
        %409 = vmatpush1.msra.mxu0 %v376
        %410 = vmatprep.subr.mxu0 0.0
        %411 = vmatpush1.msra.mxu0 %v377
        %412 = vmatprep.subr.mxu0 0.0
        %413 = vmatpush1.msra.mxu0 0.0
        %414 = vmatprep.subr.mxu0 0.0
        %415 = vmatpush1.msra.mxu0 0.0
        %416 = vmatprep.subr.mxu0 0.0
        %417 = vmatpush1.msra.mxu0 0.0
        %418 = vmatprep.subr.mxu0 0.0
        %419 = vmatpush1.msra.mxu0 0.0
        %420 = vmatprep.subr.mxu0 0.0
        %421 = vmatpush1.msra.mxu0 0.0
        %422 = vmatprep.subr.mxu0 0.0
        %423 = vmatpush1.msra.mxu0 0.0
        %424 = vmatprep.subr.mxu0 0.0
        %425 = vmatpush1.msra.mxu0 0.0
        %426 = vmatprep.subr.mxu0 0.0
        %427 = vmatpush1.msra.mxu0 0.0
        %428 = vmatprep.subr.mxu0 0.0
        %429 = vmatpush1.msra.mxu0 0.0
        %430 = vmatprep.subr.mxu0 0.0
        %431 = vmatpush1.msra.mxu0 0.0
        %432 = vmatprep.subr.mxu0 0.0
        %433 = vmatpush1.msra.mxu0 0.0
        %434 = vmatprep.subr.mxu0 0.0
        %435 = vmatpush1.msra.mxu0 0.0
        %436 = vmatprep.subr.mxu0 0.0
        %437 = vmatpush1.msra.mxu0 0.0
        %438 = vmatprep.subr.mxu0 0.0
        %439 = vmatpush1.msra.mxu0 0.0
        %440 = vmatprep.subr.mxu0 0.0
        %441 = vmatpush1.msra.mxu0 0.0
        %442 = vmatprep.subr.mxu0 0.0
        %443 = vmatpush1.msra.mxu0 0.0
        %444 = vmatprep.mubr.f32.mxu0 0.0
        %445 = vmatmul.mubr.f32.gmra.mrb[0].mxu0 %v378
        %v446 = vpop.f32.mrb[0].mxu0
        %v447 = vadd.f32 0.0, %v446
        %v448 = vpop.f32.mrb[0].mxu0
        %449 = vdwg.mxu0
        %v450 = vadd.f32 %v379, %v447
        %v451 = vmul.f32 %v378, 0.5
        %v452 = vtanh.pop %v450
        %v453 = vmul.f32 %v452, 0.5
        %v454 = vadd.f32 %v451, %v453
        %455 = vst [vmem:[%s228] sm:$0xff] %v454
        %s456 = scalar_lea.vmem [#allocation3], 8
        %v457 = vld [vmem:[%s456] sm:$0xff]
        %458 = vmatprep.subr.mxu0 0.0
        %459 = vmatpush1.msra.mxu0 %v362
        %460 = vmatprep.subr.mxu0 0.0
        %461 = vmatpush1.msra.mxu0 %v363
        %462 = vmatprep.subr.mxu0 0.0
        %463 = vmatpush1.msra.mxu0 %v364
        %464 = vmatprep.subr.mxu0 0.0
        %465 = vmatpush1.msra.mxu0 %v365
        %466 = vmatprep.subr.mxu0 0.0
        %467 = vmatpush1.msra.mxu0 %v366
        %468 = vmatprep.subr.mxu0 0.0
        %469 = vmatpush1.msra.mxu0 %v367
        %470 = vmatprep.subr.mxu0 0.0
        %471 = vmatpush1.msra.mxu0 %v368
        %472 = vmatprep.subr.mxu0 0.0
        %473 = vmatpush1.msra.mxu0 %v369
        %474 = vmatprep.subr.mxu0 0.0
        %475 = vmatpush1.msra.mxu0 %v370
        %476 = vmatprep.subr.mxu0 0.0
        %477 = vmatpush1.msra.mxu0 %v371
        %478 = vmatprep.subr.mxu0 0.0
        %479 = vmatpush1.msra.mxu0 %v372
        %480 = vmatprep.subr.mxu0 0.0
        %481 = vmatpush1.msra.mxu0 %v373
        %482 = vmatprep.subr.mxu0 0.0
        %483 = vmatpush1.msra.mxu0 %v374
        %484 = vmatprep.subr.mxu0 0.0
        %485 = vmatpush1.msra.mxu0 %v375
        %486 = vmatprep.subr.mxu0 0.0
        %487 = vmatpush1.msra.mxu0 %v376
        %488 = vmatprep.subr.mxu0 0.0
        %489 = vmatpush1.msra.mxu0 %v377
        %490 = vmatprep.subr.mxu0 0.0
        %491 = vmatpush1.msra.mxu0 0.0
        %492 = vmatprep.subr.mxu0 0.0
        %493 = vmatpush1.msra.mxu0 0.0
        %494 = vmatprep.subr.mxu0 0.0
        %495 = vmatpush1.msra.mxu0 0.0
        %496 = vmatprep.subr.mxu0 0.0
        %497 = vmatpush1.msra.mxu0 0.0
        %498 = vmatprep.subr.mxu0 0.0
        %499 = vmatpush1.msra.mxu0 0.0
        %500 = vmatprep.subr.mxu0 0.0
        %501 = vmatpush1.msra.mxu0 0.0
        %502 = vmatprep.subr.mxu0 0.0
        %503 = vmatpush1.msra.mxu0 0.0
        %504 = vmatprep.subr.mxu0 0.0
        %505 = vmatpush1.msra.mxu0 0.0
        %506 = vmatprep.subr.mxu0 0.0
        %507 = vmatpush1.msra.mxu0 0.0
        %508 = vmatprep.subr.mxu0 0.0
        %509 = vmatpush1.msra.mxu0 0.0
        %510 = vmatprep.subr.mxu0 0.0
        %511 = vmatpush1.msra.mxu0 0.0
        %512 = vmatprep.subr.mxu0 0.0
        %513 = vmatpush1.msra.mxu0 0.0
        %514 = vmatprep.subr.mxu0 0.0
        %515 = vmatpush1.msra.mxu0 0.0
        %516 = vmatprep.subr.mxu0 0.0
        %517 = vmatpush1.msra.mxu0 0.0
        %518 = vmatprep.subr.mxu0 0.0
        %519 = vmatpush1.msra.mxu0 0.0
        %520 = vmatprep.subr.mxu0 0.0
        %521 = vmatpush1.msra.mxu0 0.0
        %522 = vmatprep.mubr.f32.mxu0 0.0
        %523 = vmatmul.mubr.f32.gmra.mrb[0].mxu0 %v454
        %v524 = vpop.f32.mrb[0].mxu0
        %v525 = vadd.f32 0.0, %v524
        %v526 = vpop.f32.mrb[0].mxu0
        %527 = vdwg.mxu0
        %v528 = vadd.f32 %v457, %v525
        %v529 = vmul.f32 %v454, 0.5
        %v530 = vtanh.pop %v528
        %v531 = vmul.f32 %v530, 0.5
        %v532 = vadd.f32 %v529, %v531
        %s533 = scalar_lea.vmem %s228, 8 [#allocation7]
        %534 = vst [vmem:[%s533] sm:$0xff] %v532
        %s535 = scalar_lea.vmem [#allocation3], 16
        %v536 = vld [vmem:[%s535] sm:$0xff]
        %537 = vmatprep.subr.mxu0 0.0
        %538 = vmatpush1.msra.mxu0 %v362
        %539 = vmatprep.subr.mxu0 0.0
        %540 = vmatpush1.msra.mxu0 %v363
        %541 = vmatprep.subr.mxu0 0.0
        %542 = vmatpush1.msra.mxu0 %v364
        %543 = vmatprep.subr.mxu0 0.0
        %544 = vmatpush1.msra.mxu0 %v365
        %545 = vmatprep.subr.mxu0 0.0
        %546 = vmatpush1.msra.mxu0 %v366
        %547 = vmatprep.subr.mxu0 0.0
        %548 = vmatpush1.msra.mxu0 %v367
        %549 = vmatprep.subr.mxu0 0.0
        %550 = vmatpush1.msra.mxu0 %v368
        %551 = vmatprep.subr.mxu0 0.0
        %552 = vmatpush1.msra.mxu0 %v369
        %553 = vmatprep.subr.mxu0 0.0
        %554 = vmatpush1.msra.mxu0 %v370
        %555 = vmatprep.subr.mxu0 0.0
        %556 = vmatpush1.msra.mxu0 %v371
        %557 = vmatprep.subr.mxu0 0.0
        %558 = vmatpush1.msra.mxu0 %v372
        %559 = vmatprep.subr.mxu0 0.0
        %560 = vmatpush1.msra.mxu0 %v373
        %561 = vmatprep.subr.mxu0 0.0
        %562 = vmatpush1.msra.mxu0 %v374
        %563 = vmatprep.subr.mxu0 0.0
        %564 = vmatpush1.msra.mxu0 %v375
        %565 = vmatprep.subr.mxu0 0.0
        %566 = vmatpush1.msra.mxu0 %v376
        %567 = vmatprep.subr.mxu0 0.0
        %568 = vmatpush1.msra.mxu0 %v377
        %569 = vmatprep.subr.mxu0 0.0
        %570 = vmatpush1.msra.mxu0 0.0
        %571 = vmatprep.subr.mxu0 0.0
        %572 = vmatpush1.msra.mxu0 0.0
        %573 = vmatprep.subr.mxu0 0.0
        %574 = vmatpush1.msra.mxu0 0.0
        %575 = vmatprep.subr.mxu0 0.0
        %576 = vmatpush1.msra.mxu0 0.0
        %577 = vmatprep.subr.mxu0 0.0
        %578 = vmatpush1.msra.mxu0 0.0
        %579 = vmatprep.subr.mxu0 0.0
        %580 = vmatpush1.msra.mxu0 0.0
        %581 = vmatprep.subr.mxu0 0.0
        %582 = vmatpush1.msra.mxu0 0.0
        %583 = vmatprep.subr.mxu0 0.0
        %584 = vmatpush1.msra.mxu0 0.0
        %585 = vmatprep.subr.mxu0 0.0
        %586 = vmatpush1.msra.mxu0 0.0
        %587 = vmatprep.subr.mxu0 0.0
        %588 = vmatpush1.msra.mxu0 0.0
        %589 = vmatprep.subr.mxu0 0.0
        %590 = vmatpush1.msra.mxu0 0.0
        %591 = vmatprep.subr.mxu0 0.0
        %592 = vmatpush1.msra.mxu0 0.0
        %593 = vmatprep.subr.mxu0 0.0
        %594 = vmatpush1.msra.mxu0 0.0
        %595 = vmatprep.subr.mxu0 0.0
        %596 = vmatpush1.msra.mxu0 0.0
        %597 = vmatprep.subr.mxu0 0.0
        %598 = vmatpush1.msra.mxu0 0.0
        %599 = vmatprep.subr.mxu0 0.0
        %600 = vmatpush1.msra.mxu0 0.0
        %601 = vmatprep.mubr.f32.mxu0 0.0
        %602 = vmatmul.mubr.f32.gmra.mrb[0].mxu0 %v532
        %v603 = vpop.f32.mrb[0].mxu0
        %v604 = vadd.f32 0.0, %v603
        %v605 = vpop.f32.mrb[0].mxu0
        %606 = vdwg.mxu0
        %v607 = vadd.f32 %v536, %v604
        %v608 = vmul.f32 %v532, 0.5
        %v609 = vtanh.pop %v607
        %v610 = vmul.f32 %v609, 0.5
        %v611 = vadd.f32 %v608, %v610
        %s612 = scalar_lea.vmem %s228, 16 [#allocation7]
        %613 = vst [vmem:[%s612] sm:$0xff] %v611
        %s614 = scalar_lea.vmem [#allocation3], 24
        %v615 = vld [vmem:[%s614] sm:$0xff]
        %616 = vmatprep.subr.mxu0 0.0
        %617 = vmatpush1.msra.mxu0 %v362
        %618 = vmatprep.subr.mxu0 0.0
        %619 = vmatpush1.msra.mxu0 %v363
        %620 = vmatprep.subr.mxu0 0.0
        %621 = vmatpush1.msra.mxu0 %v364
        %622 = vmatprep.subr.mxu0 0.0
        %623 = vmatpush1.msra.mxu0 %v365
        %624 = vmatprep.subr.mxu0 0.0
        %625 = vmatpush1.msra.mxu0 %v366
        %626 = vmatprep.subr.mxu0 0.0
        %627 = vmatpush1.msra.mxu0 %v367
        %628 = vmatprep.subr.mxu0 0.0
        %629 = vmatpush1.msra.mxu0 %v368
        %630 = vmatprep.subr.mxu0 0.0
        %631 = vmatpush1.msra.mxu0 %v369
        %632 = vmatprep.subr.mxu0 0.0
        %633 = vmatpush1.msra.mxu0 %v370
        %634 = vmatprep.subr.mxu0 0.0
        %635 = vmatpush1.msra.mxu0 %v371
        %636 = vmatprep.subr.mxu0 0.0
        %637 = vmatpush1.msra.mxu0 %v372
        %638 = vmatprep.subr.mxu0 0.0
        %639 = vmatpush1.msra.mxu0 %v373
        %640 = vmatprep.subr.mxu0 0.0
        %641 = vmatpush1.msra.mxu0 %v374
        %642 = vmatprep.subr.mxu0 0.0
        %643 = vmatpush1.msra.mxu0 %v375
        %644 = vmatprep.subr.mxu0 0.0
        %645 = vmatpush1.msra.mxu0 %v376
        %646 = vmatprep.subr.mxu0 0.0
        %647 = vmatpush1.msra.mxu0 %v377
        %648 = vmatprep.subr.mxu0 0.0
        %649 = vmatpush1.msra.mxu0 0.0
        %650 = vmatprep.subr.mxu0 0.0
        %651 = vmatpush1.msra.mxu0 0.0
        %652 = vmatprep.subr.mxu0 0.0
        %653 = vmatpush1.msra.mxu0 0.0
        %654 = vmatprep.subr.mxu0 0.0
        %655 = vmatpush1.msra.mxu0 0.0
        %656 = vmatprep.subr.mxu0 0.0
        %657 = vmatpush1.msra.mxu0 0.0
        %658 = vmatprep.subr.mxu0 0.0
        %659 = vmatpush1.msra.mxu0 0.0
        %660 = vmatprep.subr.mxu0 0.0
        %661 = vmatpush1.msra.mxu0 0.0
        %662 = vmatprep.subr.mxu0 0.0
        %663 = vmatpush1.msra.mxu0 0.0
        %664 = vmatprep.subr.mxu0 0.0
        %665 = vmatpush1.msra.mxu0 0.0
        %666 = vmatprep.subr.mxu0 0.0
        %667 = vmatpush1.msra.mxu0 0.0
        %668 = vmatprep.subr.mxu0 0.0
        %669 = vmatpush1.msra.mxu0 0.0
        %670 = vmatprep.subr.mxu0 0.0
        %671 = vmatpush1.msra.mxu0 0.0
        %672 = vmatprep.subr.mxu0 0.0
        %673 = vmatpush1.msra.mxu0 0.0
        %674 = vmatprep.subr.mxu0 0.0
        %675 = vmatpush1.msra.mxu0 0.0
        %676 = vmatprep.subr.mxu0 0.0
        %677 = vmatpush1.msra.mxu0 0.0
        %678 = vmatprep.subr.mxu0 0.0
        %679 = vmatpush1.msra.mxu0 0.0
        %680 = vmatprep.mubr.f32.mxu0 0.0
        %681 = vmatmul.mubr.f32.gmra.mrb[0].mxu0 %v611
        %v682 = vpop.f32.mrb[0].mxu0
        %v683 = vadd.f32 0.0, %v682
        %v684 = vpop.f32.mrb[0].mxu0
        %685 = vdwg.mxu0
        %v686 = vadd.f32 %v615, %v683
        %v687 = vmul.f32 %v611, 0.5
        %v688 = vtanh.pop %v686
        %v689 = vmul.f32 %v688, 0.5
        %v690 = vadd.f32 %v687, %v689
        %s691 = scalar_lea.vmem %s228, 24 [#allocation7]
        %692 = vst [vmem:[%s691] sm:$0xff] %v690
        %693 = vst [vmem:[#allocation2] sm:$0xff] %v690
        %s694 = sand.u32 %s132, 1
        %s695 = scalar_lea.sflag [#allocation6], %s694
        %s696 = sand.u32 %s132, 1
        %s697 = smul.addr %s696, 32
        %s698 = scalar_lea.vmem [#allocation7], %s697
        // Predicated region
        $region45: #{tpu_custom_call.1} parent=35 // pred_check
          %p699 = pneg %p142
        $region46: #{tpu_custom_call.1} parent=35 // pred_check_branch
          %701 = sbr.rel (%p699) target = $region48
        $region47: #{tpu_custom_call.1} parent=35 // pred_region
          %s702 = smul.u32 4, %s24
          %s704 = ssub.s32 512, 512
          %705 = vsyncadd %s695, %s704
          %s706 = sadd.s32 %s23, %s702
          %s707 = smul.addr %s706, 128
          %s708 = scalar_lea.hbm %s4, %s707
          %s709 = sshll.u32 %s698, 4
          %s710 = int_to_ptr.vmem [resolvable:$true] %s709
          %715 = dma.vmem_to_hbm [thread:$0]  %s710, 512, %s708, %s695, 128, 128, 8
        $region48: #{tpu_custom_call.1} parent=35 // pred_fallthru
          _
      $region36: #{tpu_custom_call.1} parent=5 // pred_fallthru
        _
      %p716 = scmp.le.s32.totalorder 2, %s14
      // Predicated region
      $region49: #{tpu_custom_call.1} parent=5 // pred_check
        %p717 = pneg %p716
      $region50: #{tpu_custom_call.1} parent=5 // pred_check_branch
        %719 = sbr.rel (%p717) target = $region52
      $region51: #{tpu_custom_call.1} parent=5 // pred_region
        %s720 = ssub.s32 %s14, 2
        // Predicated region
        $region53: #{tpu_custom_call.1} parent=51 // pred_check
          %p721 = pneg %p148
        $region54: #{tpu_custom_call.1} parent=51 // pred_check_branch
          %723 = sbr.rel (%p721) target = $region56
        $region55: #{tpu_custom_call.1} parent=51 // pred_region
          %s724 = sand.u32 %s133, 1
          %s725 = scalar_lea.sflag [#allocation6], %s724
          %s726 = sand.u32 %s133, 1
          %s727 = smul.addr %s726, 32
          %s728 = scalar_lea.vmem [#allocation7], %s727
          %729 = dma.done %s725, 512
        $region56: #{tpu_custom_call.1} parent=51 // pred_fallthru
          _
      $region52: #{tpu_custom_call.1} parent=5 // pred_fallthru
        _
    $region6: #{tpu_custom_call.1} parent=1 // loop_footer
      %s18 = sadd.s32 1, %s14
    $region7: #{tpu_custom_call.1} parent=1 // loop_footer_branch
      %13 = sbr.rel target = $region3
    $region8: #{tpu_custom_call.1} parent=1 // loop_exit
      _
    %730 = vsyncpa [#allocation5], 1
    %s731 = scalar_lea.sflag [#allocation5], 1
    %732 = vsyncpa %s731, 1
    %733 = vsyncpa [#allocation6], 1
    %s734 = scalar_lea.sflag [#allocation6], 1
    %735 = vsyncpa %s734, 1

// kernel: tpu_custom_call.1
$region0: #{tpu_custom_call.1}
  #allocation0 [shape = 'u32[]', space=smem, size = 0x4, offset = 0x4, fixed_abs, tag = 'smem constant byte address 0x4 - core index']
  #allocation1 [shape = 'u32[144,128]{1,0:T(1,128)}', space=vmem, size = 0x12000, scoped, tag = 'internal scratch']
  #allocation2 [shape = 'f32[8,128]{1,0:T(8,128)}', space=vmem, size = 0x1000, scoped, tag = 'scratch operand']
  #allocation3 [shape = 'f32[32,128]{1,0:T(8,128)}', space=vmem, size = 0x4000, scoped, tag = 'scratch operand']
  %s0 = inlined_call_operand.vmem [shape: f32[8,8,4], index: 0, kind: input, shape index: {}]
  %s1 = inlined_call_operand.vmem [shape: f32[4,128], index: 1, kind: input, shape index: {}]
  %s2 = inlined_call_operand.hbm [shape: f32[128,128], index: 2, kind: input, shape index: {}]
  %s3 = inlined_call_operand.vmem [shape: f32[1,128], index: 3, kind: input, shape index: {}]
  %s4 = inlined_call_operand.hbm [shape: f32[8,8,128], index: 4, kind: output, shape index: {}]
  %s5 = sld [smem:[#allocation0]]
  $region57: #{tpu_custom_call.1} parent=0
    _
  %s7 = ssub.s32 1, %s5
  %s8 = scalar_select 0, %s7, %s5
  $region1: #{tpu_custom_call.1} parent=0
    #allocation4 [shape = 'u8[65536]{0}', space=vmem, size = 0x10000, scoped, tag = 'input window, operand 2, single buffered']
    #allocation5 [shape = 's32[2]{0}', space=sflag, size = 0x8, scoped, tag = 'scoped memory for tpu_custom_call.1']
    #allocation6 [shape = 's32[2]{0}', space=sflag, size = 0x8, scoped, tag = 'scoped memory for tpu_custom_call.1']
    #allocation7 [shape = 'u8[32768]{0}', space=vmem, size = 0x8000, scoped, tag = 'output window, operand 0']
    %9 = vsyncpa [#allocation5], 0
    %10 = vsyncpa [#allocation6], 0
    %s11 = scalar_lea.sflag [#allocation6], 1
    %12 = vsyncpa %s11, 0
    loop: start=0, step=1, limit=4
    $region2: #{tpu_custom_call.1} parent=1 // loop_pre_header
      _
    $region3: #{tpu_custom_call.1} parent=1 // loop_header
      %s14 = sphi 0, %s18
      %p15 = scmp.ge.s32.totalorder %s14, 4
      %s21 = sphi 0, %s33
      %s22 = sphi 0, %s29
      %s23 = sphi 0, %s21
      %s24 = sphi 0, %s22
      %s25 = sphi 0, %s23
      %s26 = sphi 0, %s24
      %s38 = sphi 0, %s40
      %s41 = sphi 0, %s38
      %s42 = sphi 0, %s41
      %s58 = sphi 0, %s42
      %s62 = sphi 0, %s62
      %s64 = sphi 0, %s62
      %s65 = sphi 0, %s64
      %s79 = sphi 0, %s65
      %s83 = sphi 0, %s83
      %s85 = sphi 0, %s83
      %s86 = sphi 0, %s85
      %s100 = sphi 0, %s86
      %s104 = sphi 0, %s104
      %s106 = sphi 0, %s104
      %s107 = sphi 0, %s106
      %s121 = sphi 0, %s107
      %s129 = sphi 0, %s131
      %s132 = sphi 0, %s129
      %s133 = sphi 0, %s132
      %s149 = sphi 0, %s133
    $region4: #{tpu_custom_call.1} parent=1 // loop_header_branch
      %17 = sbr.rel (%p15) target = $region8
    $region5: #{tpu_custom_call.1} parent=1 // loop_body
      %s19 = ssub.s32 %s14, 1
      %s20 = ssub.s32 %s14, 2
      %s27 = sadd.s32 1, %s22
      %p28 = scmp.ge.s32.totalorder %s27, 2
      %s29 = scalar_select %p28, 0, %s27
      %s30 = sadd.s32 1, %s21
      %s31 = scalar_select %p28, %s30, %s21
      %p32 = scmp.ge.s32.totalorder %s31, 1
      %s33 = scalar_select %p32, 0, %s31
      %s34 = ssub.s32 %s22, %s29
      %s35 = ssub.s32 %s21, %s33
      %s36 = sor.u32 %s34, %s35
      %p37 = scmp.eq.s32.totalorder %s36, 0
      %s39 = sadd.s32 %s38, 1
      %s40 = scalar_select %p37, %s38, %s39
      %p43 = pneg %p37
      %p44 = scmp.eq.s32.totalorder %s14, 1
      %p45 = por %p43, %p44
      %p46 = scmp.ne.s32.totalorder %s38, %s41
      %p47 = scmp.eq.s32.totalorder %s14, 0
      %p48 = por %p46, %p47
      %p49 = scmp.ne.s32.totalorder %s38, %s41
      %p50 = scmp.eq.s32.totalorder %s19, 1
      %p51 = por %p49, %p50
      %p52 = scmp.ne.s32.totalorder %s41, %s42
      %p53 = scmp.eq.s32.totalorder %s19, 0
      %p54 = por %p52, %p53
      %p55 = scmp.ne.s32.totalorder %s41, %s42
      %p56 = scmp.eq.s32.totalorder %s20, 1
      %p57 = por %p55, %p56
      %p59 = scmp.ne.s32.totalorder %s42, %s58
      %p60 = scmp.eq.s32.totalorder %s20, 0
      %p61 = por %p59, %p60
      %s63 = sadd.s32 %s62, 1
      %p66 = scmp.eq.s32.totalorder %s14, 1
      %p67 = scmp.ne.s32.totalorder %s62, %s64
      %p68 = scmp.eq.s32.totalorder %s14, 0
      %p69 = por %p67, %p68
      %p70 = scmp.ne.s32.totalorder %s62, %s64
      %p71 = scmp.eq.s32.totalorder %s19, 1
      %p72 = por %p70, %p71
      %p73 = scmp.ne.s32.totalorder %s64, %s65
      %p74 = scmp.eq.s32.totalorder %s19, 0
      %p75 = por %p73, %p74
      %p76 = scmp.ne.s32.totalorder %s64, %s65
      %p77 = scmp.eq.s32.totalorder %s20, 1
      %p78 = por %p76, %p77
      %p80 = scmp.ne.s32.totalorder %s65, %s79
      %p81 = scmp.eq.s32.totalorder %s20, 0
      %p82 = por %p80, %p81
      %s84 = sadd.s32 %s83, 1
      %p87 = scmp.eq.s32.totalorder %s14, 1
      %p88 = scmp.ne.s32.totalorder %s83, %s85
      %p89 = scmp.eq.s32.totalorder %s14, 0
      %p90 = por %p88, %p89
      %p91 = scmp.ne.s32.totalorder %s83, %s85
      %p92 = scmp.eq.s32.totalorder %s19, 1
      %p93 = por %p91, %p92
      %p94 = scmp.ne.s32.totalorder %s85, %s86
      %p95 = scmp.eq.s32.totalorder %s19, 0
      %p96 = por %p94, %p95
      %p97 = scmp.ne.s32.totalorder %s85, %s86
      %p98 = scmp.eq.s32.totalorder %s20, 1
      %p99 = por %p97, %p98
      %p101 = scmp.ne.s32.totalorder %s86, %s100
      %p102 = scmp.eq.s32.totalorder %s20, 0
      %p103 = por %p101, %p102
      %s105 = sadd.s32 %s104, 1
      %p108 = scmp.eq.s32.totalorder %s14, 1
      %p109 = scmp.ne.s32.totalorder %s104, %s106
      %p110 = scmp.eq.s32.totalorder %s14, 0
      %p111 = por %p109, %p110
      %p112 = scmp.ne.s32.totalorder %s104, %s106
      %p113 = scmp.eq.s32.totalorder %s19, 1
      %p114 = por %p112, %p113
      %p115 = scmp.ne.s32.totalorder %s106, %s107
      %p116 = scmp.eq.s32.totalorder %s19, 0
      %p117 = por %p115, %p116
      %p118 = scmp.ne.s32.totalorder %s106, %s107
      %p119 = scmp.eq.s32.totalorder %s20, 1
      %p120 = por %p118, %p119
      %p122 = scmp.ne.s32.totalorder %s107, %s121
      %p123 = scmp.eq.s32.totalorder %s20, 0
      %p124 = por %p122, %p123
      %s125 = ssub.s32 %s22, %s29
      %s126 = ssub.s32 %s21, %s33
      %s127 = sor.u32 %s125, %s126
      %p128 = scmp.eq.s32.totalorder %s127, 0
      %s130 = sadd.s32 %s129, 1
      %s131 = scalar_select %p128, %s129, %s130
      %p134 = pneg %p128
      %p135 = scmp.eq.s32.totalorder %s14, 1
      %p136 = por %p134, %p135
      %p137 = scmp.ne.s32.totalorder %s129, %s132
      %p138 = scmp.eq.s32.totalorder %s14, 0
      %p139 = por %p137, %p138
      %p140 = scmp.ne.s32.totalorder %s129, %s132
      %p141 = scmp.eq.s32.totalorder %s19, 1
      %p142 = por %p140, %p141
      %p143 = scmp.ne.s32.totalorder %s132, %s133
      %p144 = scmp.eq.s32.totalorder %s19, 0
      %p145 = por %p143, %p144
      %p146 = scmp.ne.s32.totalorder %s132, %s133
      %p147 = scmp.eq.s32.totalorder %s20, 1
      %p148 = por %p146, %p147
      %p150 = scmp.ne.s32.totalorder %s133, %s149
      %p151 = scmp.eq.s32.totalorder %s20, 0
      %p152 = por %p150, %p151
      %p153 = scmp.le.s32.totalorder 1, %s14
      %p154 = scmp.lt.s32.totalorder %s14, 3
      %p155 = pnand %p153, %p154
      %p156 = pneg %p155
      // Predicated region
      $region9: #{tpu_custom_call.1} parent=5 // pred_check
        _
      $region10: #{tpu_custom_call.1} parent=5 // pred_check_branch
        %158 = sbr.rel (%p155) target = $region12
      $region11: #{tpu_custom_call.1} parent=5 // pred_region
        %s159 = ssub.s32 %s14, 1
        // Predicated region
        $region13: #{tpu_custom_call.1} parent=11 // pred_check
          %p160 = pneg %p75
        $region14: #{tpu_custom_call.1} parent=11 // pred_check_branch
          %162 = sbr.rel (%p160) target = $region16
        $region15: #{tpu_custom_call.1} parent=11 // pred_region
          _
        $region16: #{tpu_custom_call.1} parent=11 // pred_fallthru
          _
        // Predicated region
        $region17: #{tpu_custom_call.1} parent=11 // pred_check
          %p163 = pneg %p96
        $region18: #{tpu_custom_call.1} parent=11 // pred_check_branch
          %165 = sbr.rel (%p163) target = $region20
        $region19: #{tpu_custom_call.1} parent=11 // pred_region
          %s167 = ssub.s32 2048, 2048
          %168 = vsyncadd [#allocation5], %s167
          %s169 = sshll.u32 [#allocation4], 4
          %s170 = int_to_ptr.vmem [resolvable:$true] %s169
          %175 = dma.hbm_to_vmem [thread:$0]  %s2, 2048, %s170, [#allocation5], 128, 128, 8
        $region20: #{tpu_custom_call.1} parent=11 // pred_fallthru
          _
        // Predicated region
        $region21: #{tpu_custom_call.1} parent=11 // pred_check
          %p176 = pneg %p117
        $region22: #{tpu_custom_call.1} parent=11 // pred_check_branch
          %178 = sbr.rel (%p176) target = $region24
        $region23: #{tpu_custom_call.1} parent=11 // pred_region
          _
        $region24: #{tpu_custom_call.1} parent=11 // pred_fallthru
          _
      $region12: #{tpu_custom_call.1} parent=5 // pred_fallthru
        _
      %p179 = scmp.lt.s32.totalorder %s14, 2
      // Predicated region
      $region25: #{tpu_custom_call.1} parent=5 // pred_check
        %p180 = pneg %p179
      $region26: #{tpu_custom_call.1} parent=5 // pred_check_branch
        %182 = sbr.rel (%p180) target = $region28
      $region27: #{tpu_custom_call.1} parent=5 // pred_region
        // Predicated region
        $region29: #{tpu_custom_call.1} parent=27 // pred_check
          %p183 = pneg %p48
        $region30: #{tpu_custom_call.1} parent=27 // pred_check_branch
          %185 = sbr.rel (%p183) target = $region32
        $region31: #{tpu_custom_call.1} parent=27 // pred_region
          %s186 = smul.u32 4, %s22
          %p187 = scmp.lt.s32.totalorder %s186, 7
          %s188 = scalar_select %p187, %s186, 7
          %p189 = scmp.lt.s32.totalorder %s21, 0
          %s190 = scalar_select %p189, %s21, 0
          %s191 = sadd.s32 %s190, %s188
          %s192 = smul.addr %s191, 8
          %s193 = scalar_lea.vmem %s0, %s192
          %s194 = smul.u32 4, %s22
        $region32: #{tpu_custom_call.1} parent=27 // pred_fallthru
          _
      $region28: #{tpu_custom_call.1} parent=5 // pred_fallthru
        _
      %p195 = scmp.le.s32.totalorder 1, %s14
      %p196 = scmp.lt.s32.totalorder %s14, 3
      %p197 = pnand %p195, %p196
      %p198 = pneg %p197
      // Predicated region
      $region33: #{tpu_custom_call.1} parent=5 // pred_check
        _
      $region34: #{tpu_custom_call.1} parent=5 // pred_check_branch
        %200 = sbr.rel (%p197) target = $region36
      $region35: #{tpu_custom_call.1} parent=5 // pred_region
        %s201 = ssub.s32 %s14, 1
        // Predicated region
        $region37: #{tpu_custom_call.1} parent=35 // pred_check
          %p202 = pneg %p96
        $region38: #{tpu_custom_call.1} parent=35 // pred_check_branch
          %204 = sbr.rel (%p202) target = $region40
        $region39: #{tpu_custom_call.1} parent=35 // pred_region
          %205 = dma.done [#allocation5], 2048
        $region40: #{tpu_custom_call.1} parent=35 // pred_fallthru
          _
        %s206 = smul.u32 4, %s24
        %p207 = scmp.lt.s32.totalorder %s206, 7
        %s208 = scalar_select %p207, %s206, 7
        %p209 = scmp.lt.s32.totalorder %s23, 0
        %s210 = scalar_select %p209, %s23, 0
        %s211 = sadd.s32 %s210, %s208
        %s212 = smul.addr %s211, 8
        %s213 = scalar_lea.vmem %s0, %s212
        %p214 = pneg %p54
        %p215 = pneg %p51
        %p216 = pneg %p75
        %p217 = pneg %p72
        %p218 = pneg %p96
        %p219 = pneg %p93
        %p220 = pneg %p117
        %p221 = pneg %p114
        %p222 = pneg %p145
        %p223 = pneg %p142
        %s224 = sand.u32 %s132, 1
        %s225 = scalar_lea.sflag [#allocation6], %s224
        %s226 = sand.u32 %s132, 1
        %s227 = smul.addr %s226, 32
        %s228 = scalar_lea.vmem [#allocation7], %s227
        %s229 = smul.u32 4, %s24
        %p230 = scmp.lt.s32.totalorder %s229, 7
        %s231 = scalar_select %p230, %s229, 7
        %p232 = scmp.lt.s32.totalorder %s23, 0
        %s233 = scalar_select %p232, %s23, 0
        %s234 = sadd.s32 %s233, %s231
        %s235 = smul.addr %s234, 8
        %s236 = scalar_lea.vmem %s0, %s235
        %s237 = smul.u32 4, %s24
        %s238 = smul.u32 4, %s24
        %p239 = scmp.eq.s32.totalorder %s24, 0
        // Predicated region
        $region41: #{tpu_custom_call.1} parent=35 // pred_check
          %p240 = pneg %p239
        $region42: #{tpu_custom_call.1} parent=35 // pred_check_branch
          %242 = sbr.rel (%p240) target = $region44
        $region43: #{tpu_custom_call.1} parent=35 // pred_region
          %243 = vst [vmem:[#allocation2] sm:$0xff] 0.0
        $region44: #{tpu_custom_call.1} parent=35 // pred_fallthru
          _
        %v244 = vld [vmem:[%s1] sm:$0xf]
        %v245 = vld [vmem:[%s236] sm:$0xff]
        %v246 = vld [vmem:[%s236 + $0x8] sm:$0xff]
        %v247 = vld [vmem:[%s236 + $0x10] sm:$0xff]
        %v248 = vld [vmem:[%s236 + $0x18] sm:$0xff]
        %v249 = vld [vmem:[%s3] sm:$0x1]
        %v251 = vlaneseq
        %v252 = vshrl.u32 %v251, 7
        %v253 = vsub.s32 0, %v252
        %v254 = vrot.slane %v249, %v253
        %vm256 = vcmask 31744
        %v258 = vsel %vm256, %v245, 0
        %v261 = vsel %vm256, %v246, 0
        %v264 = vsel %vm256, %v247, 0
        %v267 = vsel %vm256, %v248, 0
        %vm269 = vcmask 1043456
        %v271 = vsel %vm269, %v244, 0
        %273 = vmatprep.subr.mxu0 0.0
        %274 = vmatpush1.msra.mxu0 %v271
        %275 = vmatprep.subr.mxu0 0.0
        %276 = vmatpush1.msra.mxu0 0.0
        %277 = vmatprep.subr.mxu0 0.0
        %278 = vmatpush1.msra.mxu0 0.0
        %279 = vmatprep.subr.mxu0 0.0
        %280 = vmatpush1.msra.mxu0 0.0
        %281 = vmatprep.subr.mxu0 0.0
        %282 = vmatpush1.msra.mxu0 0.0
        %283 = vmatprep.subr.mxu0 0.0
        %284 = vmatpush1.msra.mxu0 0.0
        %285 = vmatprep.subr.mxu0 0.0
        %286 = vmatpush1.msra.mxu0 0.0
        %287 = vmatprep.subr.mxu0 0.0
        %288 = vmatpush1.msra.mxu0 0.0
        %289 = vmatprep.subr.mxu0 0.0
        %290 = vmatpush1.msra.mxu0 0.0
        %291 = vmatprep.subr.mxu0 0.0
        %292 = vmatpush1.msra.mxu0 0.0
        %293 = vmatprep.subr.mxu0 0.0
        %294 = vmatpush1.msra.mxu0 0.0
        %295 = vmatprep.subr.mxu0 0.0
        %296 = vmatpush1.msra.mxu0 0.0
        %297 = vmatprep.subr.mxu0 0.0
        %298 = vmatpush1.msra.mxu0 0.0
        %299 = vmatprep.subr.mxu0 0.0
        %300 = vmatpush1.msra.mxu0 0.0
        %301 = vmatprep.subr.mxu0 0.0
        %302 = vmatpush1.msra.mxu0 0.0
        %303 = vmatprep.subr.mxu0 0.0
        %304 = vmatpush1.msra.mxu0 0.0
        %305 = vmatprep.subr.mxu0 0.0
        %306 = vmatpush1.msra.mxu0 0.0
        %307 = vmatprep.subr.mxu0 0.0
        %308 = vmatpush1.msra.mxu0 0.0
        %309 = vmatprep.subr.mxu0 0.0
        %310 = vmatpush1.msra.mxu0 0.0
        %311 = vmatprep.subr.mxu0 0.0
        %312 = vmatpush1.msra.mxu0 0.0
        %313 = vmatprep.subr.mxu0 0.0
        %314 = vmatpush1.msra.mxu0 0.0
        %315 = vmatprep.subr.mxu0 0.0
        %316 = vmatpush1.msra.mxu0 0.0
        %317 = vmatprep.subr.mxu0 0.0
        %318 = vmatpush1.msra.mxu0 0.0
        %319 = vmatprep.subr.mxu0 0.0
        %320 = vmatpush1.msra.mxu0 0.0
        %321 = vmatprep.subr.mxu0 0.0
        %322 = vmatpush1.msra.mxu0 0.0
        %323 = vmatprep.subr.mxu0 0.0
        %324 = vmatpush1.msra.mxu0 0.0
        %325 = vmatprep.subr.mxu0 0.0
        %326 = vmatpush1.msra.mxu0 0.0
        %327 = vmatprep.subr.mxu0 0.0
        %328 = vmatpush1.msra.mxu0 0.0
        %329 = vmatprep.subr.mxu0 0.0
        %330 = vmatpush1.msra.mxu0 0.0
        %331 = vmatprep.subr.mxu0 0.0
        %332 = vmatpush1.msra.mxu0 0.0
        %333 = vmatprep.subr.mxu0 0.0
        %334 = vmatpush1.msra.mxu0 0.0
        %335 = vmatprep.subr.mxu0 0.0
        %336 = vmatpush1.msra.mxu0 0.0
        %337 = vmatprep.mubr.f32.mxu0 0.0
        %338 = vmatmul.mubr.f32.gmra.mrb[0].mxu0 %v258
        %v339 = vpop.f32.mrb[0].mxu0
        %v340 = vadd.f32 %v254, %v339
        %v341 = vpop.f32.mrb[0].mxu0
        %342 = vmatprep.mubr.f32.mxu0 0.0
        %343 = vmatmul.mubr.f32.gmra.mrb[0].mxu0 %v261
        %v344 = vpop.f32.mrb[0].mxu0
        %v345 = vadd.f32 %v254, %v344
        %v346 = vpop.f32.mrb[0].mxu0
        %347 = vmatprep.mubr.f32.mxu0 0.0
        %348 = vmatmul.mubr.f32.gmra.mrb[0].mxu0 %v264
        %v349 = vpop.f32.mrb[0].mxu0
        %v350 = vadd.f32 %v254, %v349
        %v351 = vpop.f32.mrb[0].mxu0
        %352 = vmatprep.mubr.f32.mxu0 0.0
        %353 = vmatmul.mubr.f32.gmra.mrb[0].mxu0 %v267
        %v354 = vpop.f32.mrb[0].mxu0
        %v355 = vadd.f32 %v254, %v354
        %v356 = vpop.f32.mrb[0].mxu0
        %357 = vdwg.mxu0
        %358 = vst [vmem:[#allocation3] sm:$0xff] %v340
        %359 = vst [vmem:[#allocation3 + $0x8] sm:$0xff] %v345
        %360 = vst [vmem:[#allocation3 + $0x10] sm:$0xff] %v350
        %361 = vst [vmem:[#allocation3 + $0x18] sm:$0xff] %v355
        %v362 = vld [vmem:[#allocation4] sm:$0xff]
        %v363 = vld [vmem:[#allocation4 + $0x8] sm:$0xff]
        %v364 = vld [vmem:[#allocation4 + $0x10] sm:$0xff]
        %v365 = vld [vmem:[#allocation4 + $0x18] sm:$0xff]
        %v366 = vld [vmem:[#allocation4 + $0x20] sm:$0xff]
        %v367 = vld [vmem:[#allocation4 + $0x28] sm:$0xff]
        %v368 = vld [vmem:[#allocation4 + $0x30] sm:$0xff]
        %v369 = vld [vmem:[#allocation4 + $0x38] sm:$0xff]
        %v370 = vld [vmem:[#allocation4 + $0x40] sm:$0xff]
        %v371 = vld [vmem:[#allocation4 + $0x48] sm:$0xff]
        %v372 = vld [vmem:[#allocation4 + $0x50] sm:$0xff]
        %v373 = vld [vmem:[#allocation4 + $0x58] sm:$0xff]
        %v374 = vld [vmem:[#allocation4 + $0x60] sm:$0xff]
        %v375 = vld [vmem:[#allocation4 + $0x68] sm:$0xff]
        %v376 = vld [vmem:[#allocation4 + $0x70] sm:$0xff]
        %v377 = vld [vmem:[#allocation4 + $0x78] sm:$0xff]
        %v378 = vld [vmem:[#allocation2] sm:$0xff]
        %v379 = vld [vmem:[#allocation3] sm:$0xff]
        %380 = vmatprep.subr.mxu0 0.0
        %381 = vmatpush1.msra.mxu0 %v362
        %382 = vmatprep.subr.mxu0 0.0
        %383 = vmatpush1.msra.mxu0 %v363
        %384 = vmatprep.subr.mxu0 0.0
        %385 = vmatpush1.msra.mxu0 %v364
        %386 = vmatprep.subr.mxu0 0.0
        %387 = vmatpush1.msra.mxu0 %v365
        %388 = vmatprep.subr.mxu0 0.0
        %389 = vmatpush1.msra.mxu0 %v366
        %390 = vmatprep.subr.mxu0 0.0
        %391 = vmatpush1.msra.mxu0 %v367
        %392 = vmatprep.subr.mxu0 0.0
        %393 = vmatpush1.msra.mxu0 %v368
        %394 = vmatprep.subr.mxu0 0.0
        %395 = vmatpush1.msra.mxu0 %v369
        %396 = vmatprep.subr.mxu0 0.0
        %397 = vmatpush1.msra.mxu0 %v370
        %398 = vmatprep.subr.mxu0 0.0
        %399 = vmatpush1.msra.mxu0 %v371
        %400 = vmatprep.subr.mxu0 0.0
        %401 = vmatpush1.msra.mxu0 %v372
        %402 = vmatprep.subr.mxu0 0.0
        %403 = vmatpush1.msra.mxu0 %v373
        %404 = vmatprep.subr.mxu0 0.0
        %405 = vmatpush1.msra.mxu0 %v374
        %406 = vmatprep.subr.mxu0 0.0
        %407 = vmatpush1.msra.mxu0 %v375
        %408 = vmatprep.subr.mxu0 0.0
        %409 = vmatpush1.msra.mxu0 %v376
        %410 = vmatprep.subr.mxu0 0.0
        %411 = vmatpush1.msra.mxu0 %v377
        %412 = vmatprep.subr.mxu0 0.0
        %413 = vmatpush1.msra.mxu0 0.0
        %414 = vmatprep.subr.mxu0 0.0
        %415 = vmatpush1.msra.mxu0 0.0
        %416 = vmatprep.subr.mxu0 0.0
        %417 = vmatpush1.msra.mxu0 0.0
        %418 = vmatprep.subr.mxu0 0.0
        %419 = vmatpush1.msra.mxu0 0.0
        %420 = vmatprep.subr.mxu0 0.0
        %421 = vmatpush1.msra.mxu0 0.0
        %422 = vmatprep.subr.mxu0 0.0
        %423 = vmatpush1.msra.mxu0 0.0
        %424 = vmatprep.subr.mxu0 0.0
        %425 = vmatpush1.msra.mxu0 0.0
        %426 = vmatprep.subr.mxu0 0.0
        %427 = vmatpush1.msra.mxu0 0.0
        %428 = vmatprep.subr.mxu0 0.0
        %429 = vmatpush1.msra.mxu0 0.0
        %430 = vmatprep.subr.mxu0 0.0
        %431 = vmatpush1.msra.mxu0 0.0
        %432 = vmatprep.subr.mxu0 0.0
        %433 = vmatpush1.msra.mxu0 0.0
        %434 = vmatprep.subr.mxu0 0.0
        %435 = vmatpush1.msra.mxu0 0.0
        %436 = vmatprep.subr.mxu0 0.0
        %437 = vmatpush1.msra.mxu0 0.0
        %438 = vmatprep.subr.mxu0 0.0
        %439 = vmatpush1.msra.mxu0 0.0
        %440 = vmatprep.subr.mxu0 0.0
        %441 = vmatpush1.msra.mxu0 0.0
        %442 = vmatprep.subr.mxu0 0.0
        %443 = vmatpush1.msra.mxu0 0.0
        %444 = vmatprep.mubr.f32.mxu0 0.0
        %445 = vmatmul.mubr.f32.gmra.mrb[0].mxu0 %v378
        %v446 = vpop.f32.mrb[0].mxu0
        %v447 = vadd.f32 0.0, %v446
        %v448 = vpop.f32.mrb[0].mxu0
        %449 = vdwg.mxu0
        %v450 = vadd.f32 %v379, %v447
        %v451 = vmul.f32 %v378, 0.5
        %v452 = vtanh.pop %v450
        %v453 = vmul.f32 %v452, 0.5
        %v454 = vadd.f32 %v451, %v453
        %455 = vst [vmem:[%s228] sm:$0xff] %v454
        %s456 = scalar_lea.vmem [#allocation3], 8
        %v457 = vld [vmem:[%s456] sm:$0xff]
        %458 = vmatprep.subr.mxu0 0.0
        %459 = vmatpush1.msra.mxu0 %v362
        %460 = vmatprep.subr.mxu0 0.0
        %461 = vmatpush1.msra.mxu0 %v363
        %462 = vmatprep.subr.mxu0 0.0
        %463 = vmatpush1.msra.mxu0 %v364
        %464 = vmatprep.subr.mxu0 0.0
        %465 = vmatpush1.msra.mxu0 %v365
        %466 = vmatprep.subr.mxu0 0.0
        %467 = vmatpush1.msra.mxu0 %v366
        %468 = vmatprep.subr.mxu0 0.0
        %469 = vmatpush1.msra.mxu0 %v367
        %470 = vmatprep.subr.mxu0 0.0
        %471 = vmatpush1.msra.mxu0 %v368
        %472 = vmatprep.subr.mxu0 0.0
        %473 = vmatpush1.msra.mxu0 %v369
        %474 = vmatprep.subr.mxu0 0.0
        %475 = vmatpush1.msra.mxu0 %v370
        %476 = vmatprep.subr.mxu0 0.0
        %477 = vmatpush1.msra.mxu0 %v371
        %478 = vmatprep.subr.mxu0 0.0
        %479 = vmatpush1.msra.mxu0 %v372
        %480 = vmatprep.subr.mxu0 0.0
        %481 = vmatpush1.msra.mxu0 %v373
        %482 = vmatprep.subr.mxu0 0.0
        %483 = vmatpush1.msra.mxu0 %v374
        %484 = vmatprep.subr.mxu0 0.0
        %485 = vmatpush1.msra.mxu0 %v375
        %486 = vmatprep.subr.mxu0 0.0
        %487 = vmatpush1.msra.mxu0 %v376
        %488 = vmatprep.subr.mxu0 0.0
        %489 = vmatpush1.msra.mxu0 %v377
        %490 = vmatprep.subr.mxu0 0.0
        %491 = vmatpush1.msra.mxu0 0.0
        %492 = vmatprep.subr.mxu0 0.0
        %493 = vmatpush1.msra.mxu0 0.0
        %494 = vmatprep.subr.mxu0 0.0
        %495 = vmatpush1.msra.mxu0 0.0
        %496 = vmatprep.subr.mxu0 0.0
        %497 = vmatpush1.msra.mxu0 0.0
        %498 = vmatprep.subr.mxu0 0.0
        %499 = vmatpush1.msra.mxu0 0.0
        %500 = vmatprep.subr.mxu0 0.0
        %501 = vmatpush1.msra.mxu0 0.0
        %502 = vmatprep.subr.mxu0 0.0
        %503 = vmatpush1.msra.mxu0 0.0
        %504 = vmatprep.subr.mxu0 0.0
        %505 = vmatpush1.msra.mxu0 0.0
        %506 = vmatprep.subr.mxu0 0.0
        %507 = vmatpush1.msra.mxu0 0.0
        %508 = vmatprep.subr.mxu0 0.0
        %509 = vmatpush1.msra.mxu0 0.0
        %510 = vmatprep.subr.mxu0 0.0
        %511 = vmatpush1.msra.mxu0 0.0
        %512 = vmatprep.subr.mxu0 0.0
        %513 = vmatpush1.msra.mxu0 0.0
        %514 = vmatprep.subr.mxu0 0.0
        %515 = vmatpush1.msra.mxu0 0.0
        %516 = vmatprep.subr.mxu0 0.0
        %517 = vmatpush1.msra.mxu0 0.0
        %518 = vmatprep.subr.mxu0 0.0
        %519 = vmatpush1.msra.mxu0 0.0
        %520 = vmatprep.subr.mxu0 0.0
        %521 = vmatpush1.msra.mxu0 0.0
        %522 = vmatprep.mubr.f32.mxu0 0.0
        %523 = vmatmul.mubr.f32.gmra.mrb[0].mxu0 %v454
        %v524 = vpop.f32.mrb[0].mxu0
        %v525 = vadd.f32 0.0, %v524
        %v526 = vpop.f32.mrb[0].mxu0
        %527 = vdwg.mxu0
        %v528 = vadd.f32 %v457, %v525
        %v529 = vmul.f32 %v454, 0.5
        %v530 = vtanh.pop %v528
        %v531 = vmul.f32 %v530, 0.5
        %v532 = vadd.f32 %v529, %v531
        %s533 = scalar_lea.vmem %s228, 8 [#allocation7]
        %534 = vst [vmem:[%s533] sm:$0xff] %v532
        %s535 = scalar_lea.vmem [#allocation3], 16
        %v536 = vld [vmem:[%s535] sm:$0xff]
        %537 = vmatprep.subr.mxu0 0.0
        %538 = vmatpush1.msra.mxu0 %v362
        %539 = vmatprep.subr.mxu0 0.0
        %540 = vmatpush1.msra.mxu0 %v363
        %541 = vmatprep.subr.mxu0 0.0
        %542 = vmatpush1.msra.mxu0 %v364
        %543 = vmatprep.subr.mxu0 0.0
        %544 = vmatpush1.msra.mxu0 %v365
        %545 = vmatprep.subr.mxu0 0.0
        %546 = vmatpush1.msra.mxu0 %v366
        %547 = vmatprep.subr.mxu0 0.0
        %548 = vmatpush1.msra.mxu0 %v367
        %549 = vmatprep.subr.mxu0 0.0
        %550 = vmatpush1.msra.mxu0 %v368
        %551 = vmatprep.subr.mxu0 0.0
        %552 = vmatpush1.msra.mxu0 %v369
        %553 = vmatprep.subr.mxu0 0.0
        %554 = vmatpush1.msra.mxu0 %v370
        %555 = vmatprep.subr.mxu0 0.0
        %556 = vmatpush1.msra.mxu0 %v371
        %557 = vmatprep.subr.mxu0 0.0
        %558 = vmatpush1.msra.mxu0 %v372
        %559 = vmatprep.subr.mxu0 0.0
        %560 = vmatpush1.msra.mxu0 %v373
        %561 = vmatprep.subr.mxu0 0.0
        %562 = vmatpush1.msra.mxu0 %v374
        %563 = vmatprep.subr.mxu0 0.0
        %564 = vmatpush1.msra.mxu0 %v375
        %565 = vmatprep.subr.mxu0 0.0
        %566 = vmatpush1.msra.mxu0 %v376
        %567 = vmatprep.subr.mxu0 0.0
        %568 = vmatpush1.msra.mxu0 %v377
        %569 = vmatprep.subr.mxu0 0.0
        %570 = vmatpush1.msra.mxu0 0.0
        %571 = vmatprep.subr.mxu0 0.0
        %572 = vmatpush1.msra.mxu0 0.0
        %573 = vmatprep.subr.mxu0 0.0
        %574 = vmatpush1.msra.mxu0 0.0
        %575 = vmatprep.subr.mxu0 0.0
        %576 = vmatpush1.msra.mxu0 0.0
        %577 = vmatprep.subr.mxu0 0.0
        %578 = vmatpush1.msra.mxu0 0.0
        %579 = vmatprep.subr.mxu0 0.0
        %580 = vmatpush1.msra.mxu0 0.0
        %581 = vmatprep.subr.mxu0 0.0
        %582 = vmatpush1.msra.mxu0 0.0
        %583 = vmatprep.subr.mxu0 0.0
        %584 = vmatpush1.msra.mxu0 0.0
        %585 = vmatprep.subr.mxu0 0.0
        %586 = vmatpush1.msra.mxu0 0.0
        %587 = vmatprep.subr.mxu0 0.0
        %588 = vmatpush1.msra.mxu0 0.0
        %589 = vmatprep.subr.mxu0 0.0
        %590 = vmatpush1.msra.mxu0 0.0
        %591 = vmatprep.subr.mxu0 0.0
        %592 = vmatpush1.msra.mxu0 0.0
        %593 = vmatprep.subr.mxu0 0.0
        %594 = vmatpush1.msra.mxu0 0.0
        %595 = vmatprep.subr.mxu0 0.0
        %596 = vmatpush1.msra.mxu0 0.0
        %597 = vmatprep.subr.mxu0 0.0
        %598 = vmatpush1.msra.mxu0 0.0
        %599 = vmatprep.subr.mxu0 0.0
        %600 = vmatpush1.msra.mxu0 0.0
        %601 = vmatprep.mubr.f32.mxu0 0.0
        %602 = vmatmul.mubr.f32.gmra.mrb[0].mxu0 %v532
        %v603 = vpop.f32.mrb[0].mxu0
        %v604 = vadd.f32 0.0, %v603
        %v605 = vpop.f32.mrb[0].mxu0
        %606 = vdwg.mxu0
        %v607 = vadd.f32 %v536, %v604
        %v608 = vmul.f32 %v532, 0.5
        %v609 = vtanh.pop %v607
        %v610 = vmul.f32 %v609, 0.5
        %v611 = vadd.f32 %v608, %v610
        %s612 = scalar_lea.vmem %s228, 16 [#allocation7]
        %613 = vst [vmem:[%s612] sm:$0xff] %v611
        %s614 = scalar_lea.vmem [#allocation3], 24
        %v615 = vld [vmem:[%s614] sm:$0xff]
        %616 = vmatprep.subr.mxu0 0.0
        %617 = vmatpush1.msra.mxu0 %v362
        %618 = vmatprep.subr.mxu0 0.0
        %619 = vmatpush1.msra.mxu0 %v363
        %620 = vmatprep.subr.mxu0 0.0
        %621 = vmatpush1.msra.mxu0 %v364
        %622 = vmatprep.subr.mxu0 0.0
        %623 = vmatpush1.msra.mxu0 %v365
        %624 = vmatprep.subr.mxu0 0.0
        %625 = vmatpush1.msra.mxu0 %v366
        %626 = vmatprep.subr.mxu0 0.0
        %627 = vmatpush1.msra.mxu0 %v367
        %628 = vmatprep.subr.mxu0 0.0
        %629 = vmatpush1.msra.mxu0 %v368
        %630 = vmatprep.subr.mxu0 0.0
        %631 = vmatpush1.msra.mxu0 %v369
        %632 = vmatprep.subr.mxu0 0.0
        %633 = vmatpush1.msra.mxu0 %v370
        %634 = vmatprep.subr.mxu0 0.0
        %635 = vmatpush1.msra.mxu0 %v371
        %636 = vmatprep.subr.mxu0 0.0
        %637 = vmatpush1.msra.mxu0 %v372
        %638 = vmatprep.subr.mxu0 0.0
        %639 = vmatpush1.msra.mxu0 %v373
        %640 = vmatprep.subr.mxu0 0.0
        %641 = vmatpush1.msra.mxu0 %v374
        %642 = vmatprep.subr.mxu0 0.0
        %643 = vmatpush1.msra.mxu0 %v375
        %644 = vmatprep.subr.mxu0 0.0
        %645 = vmatpush1.msra.mxu0 %v376
        %646 = vmatprep.subr.mxu0 0.0
        %647 = vmatpush1.msra.mxu0 %v377
        %648 = vmatprep.subr.mxu0 0.0
        %649 = vmatpush1.msra.mxu0 0.0
        %650 = vmatprep.subr.mxu0 0.0
        %651 = vmatpush1.msra.mxu0 0.0
        %652 = vmatprep.subr.mxu0 0.0
        %653 = vmatpush1.msra.mxu0 0.0
        %654 = vmatprep.subr.mxu0 0.0
        %655 = vmatpush1.msra.mxu0 0.0
        %656 = vmatprep.subr.mxu0 0.0
        %657 = vmatpush1.msra.mxu0 0.0
        %658 = vmatprep.subr.mxu0 0.0
        %659 = vmatpush1.msra.mxu0 0.0
        %660 = vmatprep.subr.mxu0 0.0
        %661 = vmatpush1.msra.mxu0 0.0
        %662 = vmatprep.subr.mxu0 0.0
        %663 = vmatpush1.msra.mxu0 0.0
        %664 = vmatprep.subr.mxu0 0.0
        %665 = vmatpush1.msra.mxu0 0.0
        %666 = vmatprep.subr.mxu0 0.0
        %667 = vmatpush1.msra.mxu0 0.0
        %668 = vmatprep.subr.mxu0 0.0
        %669 = vmatpush1.msra.mxu0 0.0
        %670 = vmatprep.subr.mxu0 0.0
        %671 = vmatpush1.msra.mxu0 0.0
        %672 = vmatprep.subr.mxu0 0.0
        %673 = vmatpush1.msra.mxu0 0.0
        %674 = vmatprep.subr.mxu0 0.0
        %675 = vmatpush1.msra.mxu0 0.0
        %676 = vmatprep.subr.mxu0 0.0
        %677 = vmatpush1.msra.mxu0 0.0
        %678 = vmatprep.subr.mxu0 0.0
        %679 = vmatpush1.msra.mxu0 0.0
        %680 = vmatprep.mubr.f32.mxu0 0.0
        %681 = vmatmul.mubr.f32.gmra.mrb[0].mxu0 %v611
        %v682 = vpop.f32.mrb[0].mxu0
        %v683 = vadd.f32 0.0, %v682
        %v684 = vpop.f32.mrb[0].mxu0
        %685 = vdwg.mxu0
        %v686 = vadd.f32 %v615, %v683
        %v687 = vmul.f32 %v611, 0.5
        %v688 = vtanh.pop %v686
        %v689 = vmul.f32 %v688, 0.5
        %v690 = vadd.f32 %v687, %v689
        %s691 = scalar_lea.vmem %s228, 24 [#allocation7]
        %692 = vst [vmem:[%s691] sm:$0xff] %v690
        %693 = vst [vmem:[#allocation2] sm:$0xff] %v690
        %s694 = sand.u32 %s132, 1
        %s695 = scalar_lea.sflag [#allocation6], %s694
        %s696 = sand.u32 %s132, 1
        %s697 = smul.addr %s696, 32
        %s698 = scalar_lea.vmem [#allocation7], %s697
        // Predicated region
        $region45: #{tpu_custom_call.1} parent=35 // pred_check
          %p699 = pneg %p142
        $region46: #{tpu_custom_call.1} parent=35 // pred_check_branch
          %701 = sbr.rel (%p699) target = $region48
        $region47: #{tpu_custom_call.1} parent=35 // pred_region
          %s702 = smul.u32 4, %s24
          %s704 = ssub.s32 512, 512
          %705 = vsyncadd %s695, %s704
          %s706 = sadd.s32 %s23, %s702
          %s707 = smul.addr %s706, 128
          %s708 = scalar_lea.hbm %s4, %s707
          %s709 = sshll.u32 %s698, 4
          %s710 = int_to_ptr.vmem [resolvable:$true] %s709
          %715 = dma.vmem_to_hbm [thread:$0]  %s710, 512, %s708, %s695, 128, 128, 8
        $region48: #{tpu_custom_call.1} parent=35 // pred_fallthru
          _
      $region36: #{tpu_custom_call.1} parent=5 // pred_fallthru
        _
      %p716 = scmp.le.s32.totalorder 2, %s14
      // Predicated region
      $region49: #{tpu_custom_call.1} parent=5 // pred_check
        %p717 = pneg %p716
      $region50: #{tpu_custom_call.1} parent=5 // pred_check_branch
        %719 = sbr.rel (%p717) target = $region52
      $region51: #{tpu_custom_call.1} parent=5 // pred_region
        %s720 = ssub.s32 %s14, 2
        // Predicated region
        $region53: #{tpu_custom_call.1} parent=51 // pred_check
          %p721 = pneg %p148
        $region54: #{tpu_custom_call.1} parent=51 // pred_check_branch
          %723 = sbr.rel (%p721) target = $region56
        $region55: #{tpu_custom_call.1} parent=51 // pred_region
          %s724 = sand.u32 %s133, 1
          %s725 = scalar_lea.sflag [#allocation6], %s724
          %s726 = sand.u32 %s133, 1
          %s727 = smul.addr %s726, 32
          %s728 = scalar_lea.vmem [#allocation7], %s727
          %729 = dma.done %s725, 512
        $region56: #{tpu_custom_call.1} parent=51 // pred_fallthru
          _
      $region52: #{tpu_custom_call.1} parent=5 // pred_fallthru
        _
    $region6: #{tpu_custom_call.1} parent=1 // loop_footer
      %s18 = sadd.s32 1, %s14
    $region7: #{tpu_custom_call.1} parent=1 // loop_footer_branch
      %13 = sbr.rel target = $region3
    $region8: #{tpu_custom_call.1} parent=1 // loop_exit
      _
    %730 = vsyncpa [#allocation5], 1
    %s731 = scalar_lea.sflag [#allocation5], 1
    %732 = vsyncpa %s731, 1
    %733 = vsyncpa [#allocation6], 1
    %s734 = scalar_lea.sflag [#allocation6], 1
    %735 = vsyncpa %s734, 1

</llo_original>
